<compile_context>
chip_gen: v6e
topology: v6e:2x2x1
jax: 0.10.0
libtpu: 0.0.40
codegen_flags: <defaults>
</compile_context>

<pallas_src>
import functools

import jax
import jax.numpy as jnp
import numpy as np
from jax.experimental import pallas as pl
from jax.experimental.pallas import tpu as pltpu

LN_EPS = 1e-5


def _merge_block_kernel(v_ref, w_ref, b_ref, g_ref, bt_ref, o_ref, *, Wo):
    # v_ref  : (6, (Ho+1)*Wo, C) bf16  stride-2 tap planes of one batch image,
    #          plane p = (kh % 2) * 3 + kw, plane[i, j] = xpad[2i + kh % 2, 2j + kw]
    # w_ref  : (9, C, C_out) bf16      conv weight, tap-major
    # b_ref, g_ref, bt_ref : (1, C_out) f32   conv bias / LN gamma / LN beta
    # o_ref  : (tN, C_out)             output tokens for this (batch, row-tile)
    tN, C_out = o_ref.shape
    row0 = pl.multiple_of(pl.program_id(1) * tN, 8)

    acc = jnp.zeros((tN, C_out), jnp.float32)
    for kh in range(3):                       # statically unrolled 3x3 taps
        for kw in range(3):
            plane = (kh % 2) * 3 + kw
            start = row0 + (kh // 2) * Wo     # dh in {0,1} spatial-row offset
            x_tap = v_ref[plane, pl.ds(start, tN), :]          # (tN, C) bf16
            acc = acc + jnp.dot(x_tap, w_ref[kh * 3 + kw],     # MXU, f32 accum
                                preferred_element_type=jnp.float32)

    y = acc + b_ref[...]
    # LayerNorm over C_out (biased variance, same as torch.nn.LayerNorm)
    mean = jnp.mean(y, axis=-1, keepdims=True)
    cent = y - mean
    var = jnp.mean(cent * cent, axis=-1, keepdims=True)
    out = cent * jax.lax.rsqrt(var + LN_EPS) * g_ref[...] + bt_ref[...]
    o_ref[...] = out.astype(o_ref.dtype)


def _pick_tile_rows(Ho, Wo, C_out, B):
    """Output spatial rows per grid step.  tN = tHo*Wo must be a multiple of 8
    (sublane tiling) unless a single tile covers the whole image."""
    target_rows = max(Wo, min(1024, (1 << 18) // max(4 * C_out, 1)))
    valid = [d for d in range(1, Ho + 1)
             if Ho % d == 0 and ((d * Wo) % 8 == 0 or d == Ho)]
    fitting = [d for d in valid if d * Wo <= target_rows] or [min(valid)]
    tho = max(fitting)
    if B == 1 and tho == Ho:
        smaller = [d for d in fitting if d < Ho]
        if smaller:                     # give the 2nd TensorCore work on v7x
            tho = max(smaller)
    return tho


def merge_block_forward(x, conv_w, conv_b, ln_gamma, ln_beta):
    """x: (B, H*W, C). Returns (B, (H//2)*(W//2), C_out) = conv3x3/s2 + LayerNorm."""
    B, HW, C = x.shape
    H = W = int(np.sqrt(HW))
    assert H * W == HW, "sequence length must be a perfect square"
    assert H % 2 == 0, "stride-2 merge assumes even spatial size"
    C_out = conv_w.shape[0]
    Ho, Wo = H // 2, W // 2
    N = Ho * Wo
    Hp = Ho + 1

    # --- glue: zero-pad and build the 6 stride-2 tap planes (no 9x im2col) ---
    x_nhwc = x.reshape(B, H, W, C)
    xpad = jnp.pad(x_nhwc, ((0, 0), (1, 1), (1, 1), (0, 0)))
    planes = []
    for ph in range(2):                                   # row phase   = kh % 2
        rows = xpad[:, ph::2][:, :Hp]                     # (B, Hp, W+2, C)
        for kw in range(3):                               # column tap  = kw
            planes.append(rows[:, :, kw::2][:, :, :Wo])   # (B, Hp, Wo, C)
    v = jnp.stack(planes, axis=1).reshape(B, 6, Hp * Wo, C).astype(jnp.bfloat16)

    # conv weight (C_out, C, 3, 3) -> (kh, kw, C, C_out) -> (9, C, C_out), bf16 for MXU
    w = jnp.transpose(conv_w, (2, 3, 1, 0)).reshape(9, C, C_out).astype(jnp.bfloat16)
    b_row = conv_b.reshape(1, C_out).astype(jnp.float32)
    g_row = ln_gamma.reshape(1, C_out).astype(jnp.float32)
    bt_row = ln_beta.reshape(1, C_out).astype(jnp.float32)

    tHo = _pick_tile_rows(Ho, Wo, C_out, B)
    tN = tHo * Wo
    n_tiles = Ho // tHo

    # explicit scoped-VMEM budget: double-buffered in/out blocks + weight + f32 temps
    in_blk = 6 * Hp * Wo * max(C, 128) * 2
    out_blk = tN * max(C_out, 128) * x.dtype.itemsize
    w_blk = 9 * max(C, 8) * max(C_out, 128) * 2
    temps = 4 * tN * max(C_out, 128) * 4
    vmem_limit = int(min(32 << 20,
                         max(16 << 20,
                             2 * (in_blk + out_blk) + w_blk + temps + (2 << 20))))

    out = pl.pallas_call(
        functools.partial(_merge_block_kernel, Wo=Wo),
        out_shape=jax.ShapeDtypeStruct((B, N, C_out), x.dtype),
        grid_spec=pltpu.PrefetchScalarGridSpec(
            num_scalar_prefetch=0,
            grid=(B, n_tiles),
            in_specs=[
                # tap planes: full image per batch, resident across the n axis
                pl.BlockSpec((pl.Squeezed(), 6, Hp * Wo, C),
                             lambda b, n: (b, 0, 0, 0)),
                pl.BlockSpec((9, C, C_out), lambda b, n: (0, 0, 0)),
                pl.BlockSpec((1, C_out), lambda b, n: (0, 0)),
                pl.BlockSpec((1, C_out), lambda b, n: (0, 0)),
                pl.BlockSpec((1, C_out), lambda b, n: (0, 0)),
            ],
            out_specs=pl.BlockSpec((pl.Squeezed(), tN, C_out),
                                   lambda b, n: (b, n, 0)),
        ),
        compiler_params=pltpu.CompilerParams(
            dimension_semantics=("parallel", "parallel"),
            vmem_limit_bytes=vmem_limit),
    )(v, w, b_row, g_row, bt_row)
    return out


def _reference_merge_block(x, conv_w, conv_b, ln_gamma, ln_beta):
    """Pure-JAX f32 reference (conv3x3/s2/p1 + bias + LayerNorm)."""
    B, HW, C = x.shape
    H = W = int(np.sqrt(HW))
    C_out = conv_w.shape[0]
    xi = x.reshape(B, H, W, C)
    w = jnp.transpose(conv_w, (2, 3, 1, 0))  # HWIO
    y = jax.lax.conv_general_dilated(
        xi, w, window_strides=(2, 2), padding=((1, 1), (1, 1)),
        dimension_numbers=("NHWC", "HWIO", "NHWC"),
        precision=jax.lax.Precision.HIGHEST)
    y = (y + conv_b).reshape(B, -1, C_out)
    mu = jnp.mean(y, axis=-1, keepdims=True)
    var = jnp.mean((y - mu) ** 2, axis=-1, keepdims=True)
    return (y - mu) * jax.lax.rsqrt(var + LN_EPS) * ln_gamma + ln_beta


if __name__ == "__main__":
    # small shapes consistent with the module: B=2, dim=4, H=W=16, dim_out=8
    B, C, H, W = 2, 4, 16, 16
    dim_out = 8

    key = jax.random.PRNGKey(0)
    kx, kw, kb = jax.random.split(key, 3)

    x = jax.random.normal(kx, (B, H * W, C), dtype=jnp.float32)
    conv_w = 0.1 * jax.random.normal(kw, (dim_out, C, 3, 3), dtype=jnp.float32)
    conv_b = 0.01 * jax.random.normal(kb, (dim_out,), dtype=jnp.float32)
    ln_gamma = jnp.ones((dim_out,), dtype=jnp.float32)
    ln_beta = jnp.zeros((dim_out,), dtype=jnp.float32)

    out = merge_block_forward(x, conv_w, conv_b, ln_gamma, ln_beta)
    out = jax.block_until_ready(out)

    expected_shape = (B, (H // 2) * (W // 2), dim_out)
    assert out.shape == expected_shape, (out.shape, expected_shape)
    assert bool(jnp.all(jnp.isfinite(out)))

    # loose tolerance: kernel uses bf16 MXU inputs with f32 accumulation
    ref = _reference_merge_block(x, conv_w, conv_b, ln_gamma, ln_beta)
    max_err = float(jnp.max(jnp.abs(out - ref)))
    assert max_err < 0.2, f"max abs err vs reference: {max_err}"

    print("KERNEL_OK")
</pallas_src>

<mosaic_0001>
module attributes {stable_mosaic.version = 11 : i64} {
  func.func @_merge_block_kernel(%arg0: i32, %arg1: i32, %arg2: memref<1x6x72x4xbf16, #tpu.memory_space<vmem>>, %arg3: memref<9x4x8xbf16, #tpu.memory_space<vmem>>, %arg4: memref<1x8xf32, #tpu.memory_space<vmem>>, %arg5: memref<1x8xf32, #tpu.memory_space<vmem>>, %arg6: memref<1x8xf32, #tpu.memory_space<vmem>>, %arg7: memref<1x64x8xf32, #tpu.memory_space<vmem>>) attributes {dimension_semantics = [#tpu.dimension_semantics<parallel>, #tpu.dimension_semantics<parallel>], iteration_bounds = array<i64: 2, 1>, scalar_prefetch = 0 : i64, scratch_operands = 0 : i64, tpu.core_type = #tpu.core_type<tc>, window_params = [{transform_indices = @transform_0, window_bounds = array<i64: 1, 6, 72, 4>}, {pipeline_mode = #tpu.pipeline_mode<synchronous>, transform_indices = @transform_1, window_bounds = array<i64: 9, 4, 8>}, {pipeline_mode = #tpu.pipeline_mode<synchronous>, transform_indices = @transform_2, window_bounds = array<i64: 1, 8>}, {pipeline_mode = #tpu.pipeline_mode<synchronous>, transform_indices = @transform_3, window_bounds = array<i64: 1, 8>}, {pipeline_mode = #tpu.pipeline_mode<synchronous>, transform_indices = @transform_4, window_bounds = array<i64: 1, 8>}, {transform_indices = @transform_5, window_bounds = array<i64: 1, 64, 8>}]} {
    %c64_i32 = arith.constant 64 : i32
    %0 = arith.muli %arg1, %c64_i32 : i32
    %1 = tpu.assume_multiple %0, 8 : i32
    %cst = arith.constant 0.000000e+00 : f32
    %2 = vector.broadcast %cst : f32 to vector<64x8xf32>
    %c0_i32 = arith.constant 0 : i32
    %3 = arith.addi %1, %c0_i32 : i32
    %c0 = arith.constant 0 : index
    %c0_0 = arith.constant 0 : index
    %4 = arith.index_cast %3 : i32 to index
    %c0_1 = arith.constant 0 : index
    %5 = vector.load %arg2[%c0, %c0_0, %4, %c0_1] : memref<1x6x72x4xbf16, #tpu.memory_space<vmem>>, vector<1x1x64x4xbf16>
    %6 = vector.shape_cast %5 : vector<1x1x64x4xbf16> to vector<64x4xbf16>
    %c0_2 = arith.constant 0 : index
    %c0_3 = arith.constant 0 : index
    %c0_4 = arith.constant 0 : index
    %7 = vector.load %arg3[%c0_2, %c0_3, %c0_4] : memref<9x4x8xbf16, #tpu.memory_space<vmem>>, vector<1x4x8xbf16>
    %8 = vector.shape_cast %7 : vector<1x4x8xbf16> to vector<4x8xbf16>
    %cst_5 = arith.constant dense<0.000000e+00> : vector<64x8xf32>
    %9 = tpu.matmul %6, %8, %cst_5 {dimension_numbers = #tpu.dot_dimension_numbers<[1], [0], [0], [1], [0, 0, 1, 1], [], []>} : vector<64x4xbf16>, vector<4x8xbf16>, vector<64x8xf32> -> vector<64x8xf32>
    %10 = arith.addf %2, %9 : vector<64x8xf32>
    %c0_i32_6 = arith.constant 0 : i32
    %11 = arith.addi %1, %c0_i32_6 : i32
    %c0_7 = arith.constant 0 : index
    %c1 = arith.constant 1 : index
    %12 = arith.index_cast %11 : i32 to index
    %c0_8 = arith.constant 0 : index
    %13 = vector.load %arg2[%c0_7, %c1, %12, %c0_8] : memref<1x6x72x4xbf16, #tpu.memory_space<vmem>>, vector<1x1x64x4xbf16>
    %14 = vector.shape_cast %13 : vector<1x1x64x4xbf16> to vector<64x4xbf16>
    %c1_9 = arith.constant 1 : index
    %c0_10 = arith.constant 0 : index
    %c0_11 = arith.constant 0 : index
    %15 = vector.load %arg3[%c1_9, %c0_10, %c0_11] : memref<9x4x8xbf16, #tpu.memory_space<vmem>>, vector<1x4x8xbf16>
    %16 = vector.shape_cast %15 : vector<1x4x8xbf16> to vector<4x8xbf16>
    %cst_12 = arith.constant dense<0.000000e+00> : vector<64x8xf32>
    %17 = tpu.matmul %14, %16, %cst_12 {dimension_numbers = #tpu.dot_dimension_numbers<[1], [0], [0], [1], [0, 0, 1, 1], [], []>} : vector<64x4xbf16>, vector<4x8xbf16>, vector<64x8xf32> -> vector<64x8xf32>
    %18 = arith.addf %10, %17 : vector<64x8xf32>
    %c0_i32_13 = arith.constant 0 : i32
    %19 = arith.addi %1, %c0_i32_13 : i32
    %c0_14 = arith.constant 0 : index
    %c2 = arith.constant 2 : index
    %20 = arith.index_cast %19 : i32 to index
    %c0_15 = arith.constant 0 : index
    %21 = vector.load %arg2[%c0_14, %c2, %20, %c0_15] : memref<1x6x72x4xbf16, #tpu.memory_space<vmem>>, vector<1x1x64x4xbf16>
    %22 = vector.shape_cast %21 : vector<1x1x64x4xbf16> to vector<64x4xbf16>
    %c2_16 = arith.constant 2 : index
    %c0_17 = arith.constant 0 : index
    %c0_18 = arith.constant 0 : index
    %23 = vector.load %arg3[%c2_16, %c0_17, %c0_18] : memref<9x4x8xbf16, #tpu.memory_space<vmem>>, vector<1x4x8xbf16>
    %24 = vector.shape_cast %23 : vector<1x4x8xbf16> to vector<4x8xbf16>
    %cst_19 = arith.constant dense<0.000000e+00> : vector<64x8xf32>
    %25 = tpu.matmul %22, %24, %cst_19 {dimension_numbers = #tpu.dot_dimension_numbers<[1], [0], [0], [1], [0, 0, 1, 1], [], []>} : vector<64x4xbf16>, vector<4x8xbf16>, vector<64x8xf32> -> vector<64x8xf32>
    %26 = arith.addf %18, %25 : vector<64x8xf32>
    %c0_i32_20 = arith.constant 0 : i32
    %27 = arith.addi %1, %c0_i32_20 : i32
    %c0_21 = arith.constant 0 : index
    %c3 = arith.constant 3 : index
    %28 = arith.index_cast %27 : i32 to index
    %c0_22 = arith.constant 0 : index
    %29 = vector.load %arg2[%c0_21, %c3, %28, %c0_22] : memref<1x6x72x4xbf16, #tpu.memory_space<vmem>>, vector<1x1x64x4xbf16>
    %30 = vector.shape_cast %29 : vector<1x1x64x4xbf16> to vector<64x4xbf16>
    %c3_23 = arith.constant 3 : index
    %c0_24 = arith.constant 0 : index
    %c0_25 = arith.constant 0 : index
    %31 = vector.load %arg3[%c3_23, %c0_24, %c0_25] : memref<9x4x8xbf16, #tpu.memory_space<vmem>>, vector<1x4x8xbf16>
    %32 = vector.shape_cast %31 : vector<1x4x8xbf16> to vector<4x8xbf16>
    %cst_26 = arith.constant dense<0.000000e+00> : vector<64x8xf32>
    %33 = tpu.matmul %30, %32, %cst_26 {dimension_numbers = #tpu.dot_dimension_numbers<[1], [0], [0], [1], [0, 0, 1, 1], [], []>} : vector<64x4xbf16>, vector<4x8xbf16>, vector<64x8xf32> -> vector<64x8xf32>
    %34 = arith.addf %26, %33 : vector<64x8xf32>
    %c0_i32_27 = arith.constant 0 : i32
    %35 = arith.addi %1, %c0_i32_27 : i32
    %c0_28 = arith.constant 0 : index
    %c4 = arith.constant 4 : index
    %36 = arith.index_cast %35 : i32 to index
    %c0_29 = arith.constant 0 : index
    %37 = vector.load %arg2[%c0_28, %c4, %36, %c0_29] : memref<1x6x72x4xbf16, #tpu.memory_space<vmem>>, vector<1x1x64x4xbf16>
    %38 = vector.shape_cast %37 : vector<1x1x64x4xbf16> to vector<64x4xbf16>
    %c4_30 = arith.constant 4 : index
    %c0_31 = arith.constant 0 : index
    %c0_32 = arith.constant 0 : index
    %39 = vector.load %arg3[%c4_30, %c0_31, %c0_32] : memref<9x4x8xbf16, #tpu.memory_space<vmem>>, vector<1x4x8xbf16>
    %40 = vector.shape_cast %39 : vector<1x4x8xbf16> to vector<4x8xbf16>
    %cst_33 = arith.constant dense<0.000000e+00> : vector<64x8xf32>
    %41 = tpu.matmul %38, %40, %cst_33 {dimension_numbers = #tpu.dot_dimension_numbers<[1], [0], [0], [1], [0, 0, 1, 1], [], []>} : vector<64x4xbf16>, vector<4x8xbf16>, vector<64x8xf32> -> vector<64x8xf32>
    %42 = arith.addf %34, %41 : vector<64x8xf32>
    %c0_i32_34 = arith.constant 0 : i32
    %43 = arith.addi %1, %c0_i32_34 : i32
    %c0_35 = arith.constant 0 : index
    %c5 = arith.constant 5 : index
    %44 = arith.index_cast %43 : i32 to index
    %c0_36 = arith.constant 0 : index
    %45 = vector.load %arg2[%c0_35, %c5, %44, %c0_36] : memref<1x6x72x4xbf16, #tpu.memory_space<vmem>>, vector<1x1x64x4xbf16>
    %46 = vector.shape_cast %45 : vector<1x1x64x4xbf16> to vector<64x4xbf16>
    %c5_37 = arith.constant 5 : index
    %c0_38 = arith.constant 0 : index
    %c0_39 = arith.constant 0 : index
    %47 = vector.load %arg3[%c5_37, %c0_38, %c0_39] : memref<9x4x8xbf16, #tpu.memory_space<vmem>>, vector<1x4x8xbf16>
    %48 = vector.shape_cast %47 : vector<1x4x8xbf16> to vector<4x8xbf16>
    %cst_40 = arith.constant dense<0.000000e+00> : vector<64x8xf32>
    %49 = tpu.matmul %46, %48, %cst_40 {dimension_numbers = #tpu.dot_dimension_numbers<[1], [0], [0], [1], [0, 0, 1, 1], [], []>} : vector<64x4xbf16>, vector<4x8xbf16>, vector<64x8xf32> -> vector<64x8xf32>
    %50 = arith.addf %42, %49 : vector<64x8xf32>
    %c8_i32 = arith.constant 8 : i32
    %51 = arith.addi %1, %c8_i32 : i32
    %c0_41 = arith.constant 0 : index
    %c0_42 = arith.constant 0 : index
    %52 = arith.index_cast %51 : i32 to index
    %c0_43 = arith.constant 0 : index
    %53 = vector.load %arg2[%c0_41, %c0_42, %52, %c0_43] : memref<1x6x72x4xbf16, #tpu.memory_space<vmem>>, vector<1x1x64x4xbf16>
    %54 = vector.shape_cast %53 : vector<1x1x64x4xbf16> to vector<64x4xbf16>
    %c6 = arith.constant 6 : index
    %c0_44 = arith.constant 0 : index
    %c0_45 = arith.constant 0 : index
    %55 = vector.load %arg3[%c6, %c0_44, %c0_45] : memref<9x4x8xbf16, #tpu.memory_space<vmem>>, vector<1x4x8xbf16>
    %56 = vector.shape_cast %55 : vector<1x4x8xbf16> to vector<4x8xbf16>
    %cst_46 = arith.constant dense<0.000000e+00> : vector<64x8xf32>
    %57 = tpu.matmul %54, %56, %cst_46 {dimension_numbers = #tpu.dot_dimension_numbers<[1], [0], [0], [1], [0, 0, 1, 1], [], []>} : vector<64x4xbf16>, vector<4x8xbf16>, vector<64x8xf32> -> vector<64x8xf32>
    %58 = arith.addf %50, %57 : vector<64x8xf32>
    %c8_i32_47 = arith.constant 8 : i32
    %59 = arith.addi %1, %c8_i32_47 : i32
    %c0_48 = arith.constant 0 : index
    %c1_49 = arith.constant 1 : index
    %60 = arith.index_cast %59 : i32 to index
    %c0_50 = arith.constant 0 : index
    %61 = vector.load %arg2[%c0_48, %c1_49, %60, %c0_50] : memref<1x6x72x4xbf16, #tpu.memory_space<vmem>>, vector<1x1x64x4xbf16>
    %62 = vector.shape_cast %61 : vector<1x1x64x4xbf16> to vector<64x4xbf16>
    %c7 = arith.constant 7 : index
    %c0_51 = arith.constant 0 : index
    %c0_52 = arith.constant 0 : index
    %63 = vector.load %arg3[%c7, %c0_51, %c0_52] : memref<9x4x8xbf16, #tpu.memory_space<vmem>>, vector<1x4x8xbf16>
    %64 = vector.shape_cast %63 : vector<1x4x8xbf16> to vector<4x8xbf16>
    %cst_53 = arith.constant dense<0.000000e+00> : vector<64x8xf32>
    %65 = tpu.matmul %62, %64, %cst_53 {dimension_numbers = #tpu.dot_dimension_numbers<[1], [0], [0], [1], [0, 0, 1, 1], [], []>} : vector<64x4xbf16>, vector<4x8xbf16>, vector<64x8xf32> -> vector<64x8xf32>
    %66 = arith.addf %58, %65 : vector<64x8xf32>
    %c8_i32_54 = arith.constant 8 : i32
    %67 = arith.addi %1, %c8_i32_54 : i32
    %c0_55 = arith.constant 0 : index
    %c2_56 = arith.constant 2 : index
    %68 = arith.index_cast %67 : i32 to index
    %c0_57 = arith.constant 0 : index
    %69 = vector.load %arg2[%c0_55, %c2_56, %68, %c0_57] : memref<1x6x72x4xbf16, #tpu.memory_space<vmem>>, vector<1x1x64x4xbf16>
    %70 = vector.shape_cast %69 : vector<1x1x64x4xbf16> to vector<64x4xbf16>
    %c8 = arith.constant 8 : index
    %c0_58 = arith.constant 0 : index
    %c0_59 = arith.constant 0 : index
    %71 = vector.load %arg3[%c8, %c0_58, %c0_59] : memref<9x4x8xbf16, #tpu.memory_space<vmem>>, vector<1x4x8xbf16>
    %72 = vector.shape_cast %71 : vector<1x4x8xbf16> to vector<4x8xbf16>
    %cst_60 = arith.constant dense<0.000000e+00> : vector<64x8xf32>
    %73 = tpu.matmul %70, %72, %cst_60 {dimension_numbers = #tpu.dot_dimension_numbers<[1], [0], [0], [1], [0, 0, 1, 1], [], []>} : vector<64x4xbf16>, vector<4x8xbf16>, vector<64x8xf32> -> vector<64x8xf32>
    %74 = arith.addf %66, %73 : vector<64x8xf32>
    %c0_61 = arith.constant 0 : index
    %c0_62 = arith.constant 0 : index
    %75 = vector.load %arg4[%c0_61, %c0_62] : memref<1x8xf32, #tpu.memory_space<vmem>>, vector<1x8xf32>
    %76 = vector.broadcast %75 : vector<1x8xf32> to vector<64x8xf32>
    %77 = arith.addf %74, %76 : vector<64x8xf32>
    %cst_63 = arith.constant dense<0.000000e+00> : vector<64xf32>
    %78 = vector.multi_reduction <add>, %77, %cst_63 [1] : vector<64x8xf32> to vector<64xf32>
    %79 = vector.shape_cast %78 : vector<64xf32> to vector<64x1xf32>
    %cst_64 = arith.constant 8.000000e+00 : f32
    %80 = vector.broadcast %cst_64 : f32 to vector<64x1xf32>
    %81 = arith.divf %79, %80 : vector<64x1xf32>
    %82 = vector.broadcast %81 : vector<64x1xf32> to vector<64x8xf32>
    %83 = arith.subf %77, %82 : vector<64x8xf32>
    %84 = arith.mulf %83, %83 : vector<64x8xf32>
    %cst_65 = arith.constant dense<0.000000e+00> : vector<64xf32>
    %85 = vector.multi_reduction <add>, %84, %cst_65 [1] : vector<64x8xf32> to vector<64xf32>
    %86 = vector.shape_cast %85 : vector<64xf32> to vector<64x1xf32>
    %cst_66 = arith.constant 8.000000e+00 : f32
    %87 = vector.broadcast %cst_66 : f32 to vector<64x1xf32>
    %88 = arith.divf %86, %87 : vector<64x1xf32>
    %cst_67 = arith.constant 9.99999974E-6 : f32
    %89 = vector.broadcast %cst_67 : f32 to vector<64x1xf32>
    %90 = arith.addf %88, %89 : vector<64x1xf32>
    %91 = math.rsqrt %90 : vector<64x1xf32>
    %92 = vector.broadcast %91 : vector<64x1xf32> to vector<64x8xf32>
    %93 = arith.mulf %83, %92 : vector<64x8xf32>
    %c0_68 = arith.constant 0 : index
    %c0_69 = arith.constant 0 : index
    %94 = vector.load %arg5[%c0_68, %c0_69] : memref<1x8xf32, #tpu.memory_space<vmem>>, vector<1x8xf32>
    %95 = vector.broadcast %94 : vector<1x8xf32> to vector<64x8xf32>
    %96 = arith.mulf %93, %95 : vector<64x8xf32>
    %c0_70 = arith.constant 0 : index
    %c0_71 = arith.constant 0 : index
    %97 = vector.load %arg6[%c0_70, %c0_71] : memref<1x8xf32, #tpu.memory_space<vmem>>, vector<1x8xf32>
    %98 = vector.broadcast %97 : vector<1x8xf32> to vector<64x8xf32>
    %99 = arith.addf %96, %98 : vector<64x8xf32>
    %c0_72 = arith.constant 0 : index
    %c0_73 = arith.constant 0 : index
    %c0_74 = arith.constant 0 : index
    %100 = vector.load %arg7[%c0_72, %c0_73, %c0_74] : memref<1x64x8xf32, #tpu.memory_space<vmem>>, vector<1x64x8xf32>
    %101 = vector.shape_cast %100 : vector<1x64x8xf32> to vector<64x8xf32>
    %102 = vector.shape_cast %99 : vector<64x8xf32> to vector<1x64x8xf32>
    tpu.vector_store %arg7[%c0_72, %c0_73, %c0_74], %102 {strides = array<i32>} : memref<1x64x8xf32, #tpu.memory_space<vmem>>, vector<1x64x8xf32>,
    return
  }
  func.func @transform_0(%arg0: i32, %arg1: i32) -> (i32, i32, i32, i32) {
    %c0_i32 = arith.constant 0 : i32
    %c0_i32_0 = arith.constant 0 : i32
    %c0_i32_1 = arith.constant 0 : i32
    %c0_i32_2 = arith.constant 0 : i32
    return %arg0, %c0_i32, %c0_i32_0, %c0_i32_1 : i32, i32, i32, i32
  }
  func.func @transform_1(%arg0: i32, %arg1: i32) -> (i32, i32, i32) {
    %c0_i32 = arith.constant 0 : i32
    %c0_i32_0 = arith.constant 0 : i32
    %c0_i32_1 = arith.constant 0 : i32
    %c0_i32_2 = arith.constant 0 : i32
    return %c0_i32, %c0_i32_0, %c0_i32_1 : i32, i32, i32
  }
  func.func @transform_2(%arg0: i32, %arg1: i32) -> (i32, i32) {
    %c0_i32 = arith.constant 0 : i32
    %c0_i32_0 = arith.constant 0 : i32
    %c0_i32_1 = arith.constant 0 : i32
    return %c0_i32, %c0_i32_0 : i32, i32
  }
  func.func @transform_3(%arg0: i32, %arg1: i32) -> (i32, i32) {
    %c0_i32 = arith.constant 0 : i32
    %c0_i32_0 = arith.constant 0 : i32
    %c0_i32_1 = arith.constant 0 : i32
    return %c0_i32, %c0_i32_0 : i32, i32
  }
  func.func @transform_4(%arg0: i32, %arg1: i32) -> (i32, i32) {
    %c0_i32 = arith.constant 0 : i32
    %c0_i32_0 = arith.constant 0 : i32
    %c0_i32_1 = arith.constant 0 : i32
    return %c0_i32, %c0_i32_0 : i32, i32
  }
  func.func @transform_5(%arg0: i32, %arg1: i32) -> (i32, i32, i32) {
    %c0_i32 = arith.constant 0 : i32
    %c0_i32_0 = arith.constant 0 : i32
    return %arg0, %arg1, %c0_i32 : i32, i32, i32
  }
}

</mosaic_0001>

<llo_original>
// kernel: tpu_custom_call.1
$region0: #{tpu_custom_call.1}
  #allocation0 [shape = 'u32[]', space=smem, size = 0x4, offset = 0x4, fixed_abs, tag = 'smem constant byte address 0x4 - core index']
  #allocation1 [shape = 'u32[144,128]{1,0:T(1,128)}', space=vmem, size = 0x12000, scoped, tag = 'internal scratch']
  %s0 = inlined_call_operand.vmem [shape: bf16[2,6,72,4], index: 0, kind: input, shape index: {}]
  %s1 = inlined_call_operand.vmem [shape: bf16[9,4,8], index: 1, kind: input, shape index: {}]
  %s2 = inlined_call_operand.vmem [shape: f32[1,8], index: 2, kind: input, shape index: {}]
  %s3 = inlined_call_operand.vmem [shape: f32[1,8], index: 3, kind: input, shape index: {}]
  %s4 = inlined_call_operand.vmem [shape: f32[1,8], index: 4, kind: input, shape index: {}]
  %s5 = inlined_call_operand.vmem [shape: f32[2,64,8], index: 5, kind: output, shape index: {}]
  %s6 = sld [smem:[#allocation0]]
  $region53: #{tpu_custom_call.1} parent=0
    _
  %s8 = ssub.s32 1, %s6
  %s9 = scalar_select 0, %s8, %s6
  loop: start=0, step=1, limit=4
  $region2: #{tpu_custom_call.1} parent=0 // loop_pre_header
    _
  $region3: #{tpu_custom_call.1} parent=0 // loop_header
    %s11 = sphi 0, %s15
    %p12 = scmp.ge.s32.totalorder %s11, 4
    %s18 = sphi 0, %s30
    %s19 = sphi 0, %s26
    %s20 = sphi 0, %s18
    %s21 = sphi 0, %s19
    %s22 = sphi 0, %s20
    %s23 = sphi 0, %s21
    %s33 = sphi 0, %s35
    %s36 = sphi 0, %s33
    %s37 = sphi 0, %s36
    %s53 = sphi 0, %s37
    %s57 = sphi 0, %s57
    %s59 = sphi 0, %s57
    %s60 = sphi 0, %s59
    %s74 = sphi 0, %s60
    %s78 = sphi 0, %s78
    %s80 = sphi 0, %s78
    %s81 = sphi 0, %s80
    %s95 = sphi 0, %s81
    %s99 = sphi 0, %s99
    %s101 = sphi 0, %s99
    %s102 = sphi 0, %s101
    %s116 = sphi 0, %s102
    %s120 = sphi 0, %s120
    %s122 = sphi 0, %s120
    %s123 = sphi 0, %s122
    %s137 = sphi 0, %s123
    %s145 = sphi 0, %s147
    %s148 = sphi 0, %s145
    %s149 = sphi 0, %s148
    %s165 = sphi 0, %s149
  $region4: #{tpu_custom_call.1} parent=0 // loop_header_branch
    %14 = sbr.rel (%p12) target = $region8
  $region5: #{tpu_custom_call.1} parent=0 // loop_body
    %s16 = ssub.s32 %s11, 1
    %s17 = ssub.s32 %s11, 2
    %s24 = sadd.s32 1, %s19
    %p25 = scmp.ge.s32.totalorder %s24, 1
    %s26 = scalar_select %p25, 0, %s24
    %s27 = sadd.s32 1, %s18
    %s28 = scalar_select %p25, %s27, %s18
    %p29 = scmp.ge.s32.totalorder %s28, 2
    %s30 = scalar_select %p29, 0, %s28
    %s31 = ssub.s32 %s18, %s30
    %p32 = scmp.eq.s32.totalorder %s31, 0
    %s34 = sadd.s32 %s33, 1
    %s35 = scalar_select %p32, %s33, %s34
    %p38 = pneg %p32
    %p39 = scmp.eq.s32.totalorder %s11, 1
    %p40 = por %p38, %p39
    %p41 = scmp.ne.s32.totalorder %s33, %s36
    %p42 = scmp.eq.s32.totalorder %s11, 0
    %p43 = por %p41, %p42
    %p44 = scmp.ne.s32.totalorder %s33, %s36
    %p45 = scmp.eq.s32.totalorder %s16, 1
    %p46 = por %p44, %p45
    %p47 = scmp.ne.s32.totalorder %s36, %s37
    %p48 = scmp.eq.s32.totalorder %s16, 0
    %p49 = por %p47, %p48
    %p50 = scmp.ne.s32.totalorder %s36, %s37
    %p51 = scmp.eq.s32.totalorder %s17, 1
    %p52 = por %p50, %p51
    %p54 = scmp.ne.s32.totalorder %s37, %s53
    %p55 = scmp.eq.s32.totalorder %s17, 0
    %p56 = por %p54, %p55
    %s58 = sadd.s32 %s57, 1
    %p61 = scmp.eq.s32.totalorder %s11, 1
    %p62 = scmp.ne.s32.totalorder %s57, %s59
    %p63 = scmp.eq.s32.totalorder %s11, 0
    %p64 = por %p62, %p63
    %p65 = scmp.ne.s32.totalorder %s57, %s59
    %p66 = scmp.eq.s32.totalorder %s16, 1
    %p67 = por %p65, %p66
    %p68 = scmp.ne.s32.totalorder %s59, %s60
    %p69 = scmp.eq.s32.totalorder %s16, 0
    %p70 = por %p68, %p69
    %p71 = scmp.ne.s32.totalorder %s59, %s60
    %p72 = scmp.eq.s32.totalorder %s17, 1
    %p73 = por %p71, %p72
    %p75 = scmp.ne.s32.totalorder %s60, %s74
    %p76 = scmp.eq.s32.totalorder %s17, 0
    %p77 = por %p75, %p76
    %s79 = sadd.s32 %s78, 1
    %p82 = scmp.eq.s32.totalorder %s11, 1
    %p83 = scmp.ne.s32.totalorder %s78, %s80
    %p84 = scmp.eq.s32.totalorder %s11, 0
    %p85 = por %p83, %p84
    %p86 = scmp.ne.s32.totalorder %s78, %s80
    %p87 = scmp.eq.s32.totalorder %s16, 1
    %p88 = por %p86, %p87
    %p89 = scmp.ne.s32.totalorder %s80, %s81
    %p90 = scmp.eq.s32.totalorder %s16, 0
    %p91 = por %p89, %p90
    %p92 = scmp.ne.s32.totalorder %s80, %s81
    %p93 = scmp.eq.s32.totalorder %s17, 1
    %p94 = por %p92, %p93
    %p96 = scmp.ne.s32.totalorder %s81, %s95
    %p97 = scmp.eq.s32.totalorder %s17, 0
    %p98 = por %p96, %p97
    %s100 = sadd.s32 %s99, 1
    %p103 = scmp.eq.s32.totalorder %s11, 1
    %p104 = scmp.ne.s32.totalorder %s99, %s101
    %p105 = scmp.eq.s32.totalorder %s11, 0
    %p106 = por %p104, %p105
    %p107 = scmp.ne.s32.totalorder %s99, %s101
    %p108 = scmp.eq.s32.totalorder %s16, 1
    %p109 = por %p107, %p108
    %p110 = scmp.ne.s32.totalorder %s101, %s102
    %p111 = scmp.eq.s32.totalorder %s16, 0
    %p112 = por %p110, %p111
    %p113 = scmp.ne.s32.totalorder %s101, %s102
    %p114 = scmp.eq.s32.totalorder %s17, 1
    %p115 = por %p113, %p114
    %p117 = scmp.ne.s32.totalorder %s102, %s116
    %p118 = scmp.eq.s32.totalorder %s17, 0
    %p119 = por %p117, %p118
    %s121 = sadd.s32 %s120, 1
    %p124 = scmp.eq.s32.totalorder %s11, 1
    %p125 = scmp.ne.s32.totalorder %s120, %s122
    %p126 = scmp.eq.s32.totalorder %s11, 0
    %p127 = por %p125, %p126
    %p128 = scmp.ne.s32.totalorder %s120, %s122
    %p129 = scmp.eq.s32.totalorder %s16, 1
    %p130 = por %p128, %p129
    %p131 = scmp.ne.s32.totalorder %s122, %s123
    %p132 = scmp.eq.s32.totalorder %s16, 0
    %p133 = por %p131, %p132
    %p134 = scmp.ne.s32.totalorder %s122, %s123
    %p135 = scmp.eq.s32.totalorder %s17, 1
    %p136 = por %p134, %p135
    %p138 = scmp.ne.s32.totalorder %s123, %s137
    %p139 = scmp.eq.s32.totalorder %s17, 0
    %p140 = por %p138, %p139
    %s141 = ssub.s32 %s18, %s30
    %s142 = ssub.s32 %s19, %s26
    %s143 = sor.u32 %s141, %s142
    %p144 = scmp.eq.s32.totalorder %s143, 0
    %s146 = sadd.s32 %s145, 1
    %s147 = scalar_select %p144, %s145, %s146
    %p150 = pneg %p144
    %p151 = scmp.eq.s32.totalorder %s11, 1
    %p152 = por %p150, %p151
    %p153 = scmp.ne.s32.totalorder %s145, %s148
    %p154 = scmp.eq.s32.totalorder %s11, 0
    %p155 = por %p153, %p154
    %p156 = scmp.ne.s32.totalorder %s145, %s148
    %p157 = scmp.eq.s32.totalorder %s16, 1
    %p158 = por %p156, %p157
    %p159 = scmp.ne.s32.totalorder %s148, %s149
    %p160 = scmp.eq.s32.totalorder %s16, 0
    %p161 = por %p159, %p160
    %p162 = scmp.ne.s32.totalorder %s148, %s149
    %p163 = scmp.eq.s32.totalorder %s17, 1
    %p164 = por %p162, %p163
    %p166 = scmp.ne.s32.totalorder %s149, %s165
    %p167 = scmp.eq.s32.totalorder %s17, 0
    %p168 = por %p166, %p167
    %p169 = scmp.le.s32.totalorder 1, %s11
    %p170 = scmp.lt.s32.totalorder %s11, 3
    %p171 = pnand %p169, %p170
    %p172 = pneg %p171
    // Predicated region
    $region9: #{tpu_custom_call.1} parent=5 // pred_check
      _
    $region10: #{tpu_custom_call.1} parent=5 // pred_check_branch
      %174 = sbr.rel (%p171) target = $region12
    $region11: #{tpu_custom_call.1} parent=5 // pred_region
      %s175 = ssub.s32 %s11, 1
      // Predicated region
      $region13: #{tpu_custom_call.1} parent=11 // pred_check
        %p176 = pneg %p70
      $region14: #{tpu_custom_call.1} parent=11 // pred_check_branch
        %178 = sbr.rel (%p176) target = $region16
      $region15: #{tpu_custom_call.1} parent=11 // pred_region
        _
      $region16: #{tpu_custom_call.1} parent=11 // pred_fallthru
        _
      // Predicated region
      $region17: #{tpu_custom_call.1} parent=11 // pred_check
        %p179 = pneg %p91
      $region18: #{tpu_custom_call.1} parent=11 // pred_check_branch
        %181 = sbr.rel (%p179) target = $region20
      $region19: #{tpu_custom_call.1} parent=11 // pred_region
        _
      $region20: #{tpu_custom_call.1} parent=11 // pred_fallthru
        _
      // Predicated region
      $region21: #{tpu_custom_call.1} parent=11 // pred_check
        %p182 = pneg %p112
      $region22: #{tpu_custom_call.1} parent=11 // pred_check_branch
        %184 = sbr.rel (%p182) target = $region24
      $region23: #{tpu_custom_call.1} parent=11 // pred_region
        _
      $region24: #{tpu_custom_call.1} parent=11 // pred_fallthru
        _
      // Predicated region
      $region25: #{tpu_custom_call.1} parent=11 // pred_check
        %p185 = pneg %p133
      $region26: #{tpu_custom_call.1} parent=11 // pred_check_branch
        %187 = sbr.rel (%p185) target = $region28
      $region27: #{tpu_custom_call.1} parent=11 // pred_region
        _
      $region28: #{tpu_custom_call.1} parent=11 // pred_fallthru
        _
    $region12: #{tpu_custom_call.1} parent=5 // pred_fallthru
      _
    %p188 = scmp.lt.s32.totalorder %s11, 2
    // Predicated region
    $region29: #{tpu_custom_call.1} parent=5 // pred_check
      %p189 = pneg %p188
    $region30: #{tpu_custom_call.1} parent=5 // pred_check_branch
      %191 = sbr.rel (%p189) target = $region32
    $region31: #{tpu_custom_call.1} parent=5 // pred_region
      // Predicated region
      $region33: #{tpu_custom_call.1} parent=31 // pred_check
        %p192 = pneg %p43
      $region34: #{tpu_custom_call.1} parent=31 // pred_check_branch
        %194 = sbr.rel (%p192) target = $region36
      $region35: #{tpu_custom_call.1} parent=31 // pred_region
        %p195 = scmp.lt.s32.totalorder %s18, 1
        %s196 = scalar_select %p195, %s18, 1
        %s197 = smul.addr %s196, 54
        %s198 = smul.addr %s197, 4
        %s199 = scalar_lea.vmem %s0, %s198
      $region36: #{tpu_custom_call.1} parent=31 // pred_fallthru
        _
    $region32: #{tpu_custom_call.1} parent=5 // pred_fallthru
      _
    %p200 = scmp.le.s32.totalorder 1, %s11
    %p201 = scmp.lt.s32.totalorder %s11, 3
    %p202 = pnand %p200, %p201
    %p203 = pneg %p202
    // Predicated region
    $region37: #{tpu_custom_call.1} parent=5 // pred_check
      _
    $region38: #{tpu_custom_call.1} parent=5 // pred_check_branch
      %205 = sbr.rel (%p202) target = $region40
    $region39: #{tpu_custom_call.1} parent=5 // pred_region
      %s206 = ssub.s32 %s11, 1
      %p207 = scmp.lt.s32.totalorder %s20, 1
      %s208 = scalar_select %p207, %s20, 1
      %s209 = smul.addr %s208, 54
      %s210 = smul.addr %s209, 4
      %s211 = scalar_lea.vmem %s0, %s210
      %p212 = pneg %p49
      %p213 = pneg %p46
      %p214 = pneg %p70
      %p215 = pneg %p67
      %p216 = pneg %p91
      %p217 = pneg %p88
      %p218 = pneg %p112
      %p219 = pneg %p109
      %p220 = pneg %p133
      %p221 = pneg %p130
      %p222 = pneg %p161
      %p223 = pneg %p158
      %s224 = smul.u32 8, %s21
      %p225 = scmp.lt.s32.totalorder %s20, 1
      %s226 = scalar_select %p225, %s20, 1
      %p227 = scmp.lt.s32.totalorder %s224, 7
      %s228 = scalar_select %p227, %s224, 7
      %s229 = smul.addr %s226, 8
      %s230 = sadd.s32 %s228, %s229
      %s231 = smul.addr %s230, 8
      %s232 = scalar_lea.vmem %s5, %s231
      %p233 = scmp.lt.s32.totalorder %s20, 1
      %s234 = scalar_select %p233, %s20, 1
      %s235 = smul.addr %s234, 54
      %s236 = smul.addr %s235, 4
      %s237 = scalar_lea.vmem %s0, %s236
      %s238 = smul.u32 8, %s21
      %p239 = scmp.lt.s32.totalorder %s20, 1
      %s240 = scalar_select %p239, %s20, 1
      %p241 = scmp.lt.s32.totalorder %s238, 7
      %s242 = scalar_select %p241, %s238, 7
      %s243 = smul.addr %s240, 8
      %s244 = sadd.s32 %s242, %s243
      %s245 = smul.addr %s244, 8
      %s246 = scalar_lea.vmem %s5, %s245
      %s247 = smul.u32 8, %s21
      %s249 = smul.u32 %s21, 64
      %s250 = sshra.s32 %s249, 3
      %s251 = sand.u32 %s249, 7
      %s252 = smul.addr %s250, 4
      %s253 = scalar_lea.vmem %s237, %s252
      %v254 = vld [vmem:[%s253] sm:$0xf]
      %v255 = vld [vmem:[%s253 + $0x4] sm:$0xf]
      %v256 = vld [vmem:[%s253 + $0x8] sm:$0xf]
      %v257 = vld [vmem:[%s253 + $0xc] sm:$0xf]
      %v258 = vld [vmem:[%s253 + $0x10] sm:$0xf]
      %v259 = vld [vmem:[%s253 + $0x14] sm:$0xf]
      %v260 = vld [vmem:[%s253 + $0x18] sm:$0xf]
      %v261 = vld [vmem:[%s253 + $0x1c] sm:$0xf]
      %v262 = vld [vmem:[%s1] sm:$0x3]
      %s263 = sadd.s32 %s250, 9
      %s264 = smul.addr %s263, 4
      %s265 = scalar_lea.vmem %s237, %s264
      %v266 = vld [vmem:[%s265] sm:$0xf]
      %v267 = vld [vmem:[%s265 + $0x4] sm:$0xf]
      %v268 = vld [vmem:[%s265 + $0x8] sm:$0xf]
      %v269 = vld [vmem:[%s265 + $0xc] sm:$0xf]
      %v270 = vld [vmem:[%s265 + $0x10] sm:$0xf]
      %v271 = vld [vmem:[%s265 + $0x14] sm:$0xf]
      %v272 = vld [vmem:[%s265 + $0x18] sm:$0xf]
      %v273 = vld [vmem:[%s265 + $0x1c] sm:$0xf]
      %s274 = scalar_lea.vmem %s1, 2
      %v275 = vld [vmem:[%s274] sm:$0x3]
      %v284 = vunpack.c.l.b16 %v266
      %v285 = vunpack.c.l.b16 %v267
      %v286 = vunpack.c.l.b16 %v268
      %v287 = vunpack.c.l.b16 %v269
      %v288 = vunpack.c.l.b16 %v270
      %v289 = vunpack.c.l.b16 %v271
      %v290 = vunpack.c.l.b16 %v272
      %v291 = vunpack.c.l.b16 %v273
      %v292 = vpack.c.b16 %v285, %v284
      %v293 = vpack.c.b16 %v287, %v286
      %v294 = vpack.c.b16 %v289, %v288
      %v295 = vpack.c.b16 %v291, %v290
      %vm296 = vcmask 31744
      %v298 = vsel %vm296, %v292, 0
      %v301 = vsel %vm296, %v293, 0
      %v304 = vsel %vm296, %v294, 0
      %v307 = vsel %vm296, %v295, 0
      %vm309 = vcmask 1041408
      %v311 = vsel %vm309, %v275, 0
      %313 = vmatprep.subr.bf16.mxu0 0
      %314 = vmatpush1.bf16.msra.mxu0 0
      %315 = vmatprep.subr.bf16.mxu0 0
      %316 = vmatpush1.bf16.msra.mxu0 0
      %317 = vmatprep.subr.bf16.mxu0 0
      %318 = vmatpush1.bf16.msra.mxu0 0
      %319 = vmatprep.subr.bf16.mxu0 0
      %320 = vmatpush1.bf16.msra.mxu0 0
      %321 = vmatprep.subr.bf16.mxu0 0
      %322 = vmatpush1.bf16.msra.mxu0 0
      %323 = vmatprep.subr.bf16.mxu0 0
      %324 = vmatpush1.bf16.msra.mxu0 0
      %325 = vmatprep.subr.bf16.mxu0 0
      %326 = vmatpush1.bf16.msra.mxu0 0
      %327 = vmatprep.subr.bf16.mxu0 0
      %328 = vmatpush1.bf16.msra.mxu0 %v311
      %329 = vmatprep.subr.bf16.mxu0 0
      %330 = vmatpush2.bf16.msra.mxu0 0
      %331 = vmatprep.subr.bf16.mxu0 0
      %332 = vmatpush2.bf16.msra.mxu0 0
      %333 = vmatprep.subr.bf16.mxu0 0
      %334 = vmatpush2.bf16.msra.mxu0 0
      %335 = vmatprep.subr.bf16.mxu0 0
      %336 = vmatpush2.bf16.msra.mxu0 0
      %337 = vmatprep.subr.bf16.mxu0 0
      %338 = vmatpush2.bf16.msra.mxu0 0
      %339 = vmatprep.subr.bf16.mxu0 0
      %340 = vmatpush2.bf16.msra.mxu0 0
      %341 = vmatprep.subr.bf16.mxu0 0
      %342 = vmatpush2.bf16.msra.mxu0 0
      %343 = vmatprep.subr.bf16.mxu0 0
      %344 = vmatpush2.bf16.msra.mxu0 0
      %345 = vmatprep.mubr.bf16.mxu0 0
      %346 = vmatmul.mubr.bf16.gmra.mxu0 %v298
      %v347 = vpop.f32.mrf.mxu0
      %v348 = vadd.f32 0.0, %v347
      %v349 = vpop.f32.mrf.mxu0
      %v350 = vpop.f32.mrf.mxu0
      %v351 = vadd.f32 0.0, %v350
      %v352 = vpop.f32.mrf.mxu0
      %353 = vmatprep.mubr.bf16.mxu0 0
      %354 = vmatmul.mubr.bf16.gmra.mxu0 %v301
      %v355 = vpop.f32.mrf.mxu0
      %v356 = vadd.f32 0.0, %v355
      %v357 = vpop.f32.mrf.mxu0
      %v358 = vpop.f32.mrf.mxu0
      %v359 = vadd.f32 0.0, %v358
      %v360 = vpop.f32.mrf.mxu0
      %361 = vmatprep.mubr.bf16.mxu0 0
      %362 = vmatmul.mubr.bf16.gmra.mxu0 %v304
      %v363 = vpop.f32.mrf.mxu0
      %v364 = vadd.f32 0.0, %v363
      %v365 = vpop.f32.mrf.mxu0
      %v366 = vpop.f32.mrf.mxu0
      %v367 = vadd.f32 0.0, %v366
      %v368 = vpop.f32.mrf.mxu0
      %369 = vmatprep.mubr.bf16.mxu0 0
      %370 = vmatmul.mubr.bf16.gmra.mxu0 %v307
      %v371 = vpop.f32.mrf.mxu0
      %v372 = vadd.f32 0.0, %v371
      %v373 = vpop.f32.mrf.mxu0
      %v374 = vpop.f32.mrf.mxu0
      %v375 = vadd.f32 0.0, %v374
      %v376 = vpop.f32.mrf.mxu0
      %377 = vdwg.mxu0
      %v386 = vunpack.c.l.b16 %v254
      %v387 = vunpack.c.l.b16 %v255
      %v388 = vunpack.c.l.b16 %v256
      %v389 = vunpack.c.l.b16 %v257
      %v390 = vunpack.c.l.b16 %v258
      %v391 = vunpack.c.l.b16 %v259
      %v392 = vunpack.c.l.b16 %v260
      %v393 = vunpack.c.l.b16 %v261
      %v394 = vpack.c.b16 %v387, %v386
      %v395 = vpack.c.b16 %v389, %v388
      %v396 = vpack.c.b16 %v391, %v390
      %v397 = vpack.c.b16 %v393, %v392
      %v399 = vsel %vm296, %v394, 0
      %v402 = vsel %vm296, %v395, 0
      %v405 = vsel %vm296, %v396, 0
      %v408 = vsel %vm296, %v397, 0
      %v411 = vsel %vm309, %v262, 0
      %413 = vmatprep.subr.bf16.mxu0 0
      %414 = vmatpush1.bf16.msra.mxu0 0
      %415 = vmatprep.subr.bf16.mxu0 0
      %416 = vmatpush1.bf16.msra.mxu0 0
      %417 = vmatprep.subr.bf16.mxu0 0
      %418 = vmatpush1.bf16.msra.mxu0 0
      %419 = vmatprep.subr.bf16.mxu0 0
      %420 = vmatpush1.bf16.msra.mxu0 0
      %421 = vmatprep.subr.bf16.mxu0 0
      %422 = vmatpush1.bf16.msra.mxu0 0
      %423 = vmatprep.subr.bf16.mxu0 0
      %424 = vmatpush1.bf16.msra.mxu0 0
      %425 = vmatprep.subr.bf16.mxu0 0
      %426 = vmatpush1.bf16.msra.mxu0 0
      %427 = vmatprep.subr.bf16.mxu0 0
      %428 = vmatpush1.bf16.msra.mxu0 %v411
      %429 = vmatprep.subr.bf16.mxu0 0
      %430 = vmatpush2.bf16.msra.mxu0 0
      %431 = vmatprep.subr.bf16.mxu0 0
      %432 = vmatpush2.bf16.msra.mxu0 0
      %433 = vmatprep.subr.bf16.mxu0 0
      %434 = vmatpush2.bf16.msra.mxu0 0
      %435 = vmatprep.subr.bf16.mxu0 0
      %436 = vmatpush2.bf16.msra.mxu0 0
      %437 = vmatprep.subr.bf16.mxu0 0
      %438 = vmatpush2.bf16.msra.mxu0 0
      %439 = vmatprep.subr.bf16.mxu0 0
      %440 = vmatpush2.bf16.msra.mxu0 0
      %441 = vmatprep.subr.bf16.mxu0 0
      %442 = vmatpush2.bf16.msra.mxu0 0
      %443 = vmatprep.subr.bf16.mxu0 0
      %444 = vmatpush2.bf16.msra.mxu0 0
      %445 = vmatprep.mubr.bf16.mxu0 0
      %446 = vmatmul.mubr.bf16.gmra.mxu0 %v399
      %v447 = vpop.f32.mrf.mxu0
      %v448 = vadd.f32 %v348, %v447
      %v449 = vpop.f32.mrf.mxu0
      %v450 = vpop.f32.mrf.mxu0
      %v451 = vadd.f32 %v351, %v450
      %v452 = vpop.f32.mrf.mxu0
      %453 = vmatprep.mubr.bf16.mxu0 0
      %454 = vmatmul.mubr.bf16.gmra.mxu0 %v402
      %v455 = vpop.f32.mrf.mxu0
      %v456 = vadd.f32 %v356, %v455
      %v457 = vpop.f32.mrf.mxu0
      %v458 = vpop.f32.mrf.mxu0
      %v459 = vadd.f32 %v359, %v458
      %v460 = vpop.f32.mrf.mxu0
      %461 = vmatprep.mubr.bf16.mxu0 0
      %462 = vmatmul.mubr.bf16.gmra.mxu0 %v405
      %v463 = vpop.f32.mrf.mxu0
      %v464 = vadd.f32 %v364, %v463
      %v465 = vpop.f32.mrf.mxu0
      %v466 = vpop.f32.mrf.mxu0
      %v467 = vadd.f32 %v367, %v466
      %v468 = vpop.f32.mrf.mxu0
      %469 = vmatprep.mubr.bf16.mxu0 0
      %470 = vmatmul.mubr.bf16.gmra.mxu0 %v408
      %v471 = vpop.f32.mrf.mxu0
      %v472 = vadd.f32 %v372, %v471
      %v473 = vpop.f32.mrf.mxu0
      %v474 = vpop.f32.mrf.mxu0
      %v475 = vadd.f32 %v375, %v474
      %v476 = vpop.f32.mrf.mxu0
      %477 = vdwg.mxu0
      %s478 = sadd.s32 %s250, 18
      %s479 = smul.addr %s478, 4
      %s480 = scalar_lea.vmem %s237, %s479
      %v481 = vld [vmem:[%s480] sm:$0xf]
      %v482 = vld [vmem:[%s480 + $0x4] sm:$0xf]
      %v483 = vld [vmem:[%s480 + $0x8] sm:$0xf]
      %v484 = vld [vmem:[%s480 + $0xc] sm:$0xf]
      %v485 = vld [vmem:[%s480 + $0x10] sm:$0xf]
      %v486 = vld [vmem:[%s480 + $0x14] sm:$0xf]
      %v487 = vld [vmem:[%s480 + $0x18] sm:$0xf]
      %v488 = vld [vmem:[%s480 + $0x1c] sm:$0xf]
      %s489 = scalar_lea.vmem %s1, 4
      %v490 = vld [vmem:[%s489] sm:$0x3]
      %v499 = vunpack.c.l.b16 %v481
      %v500 = vunpack.c.l.b16 %v482
      %v501 = vunpack.c.l.b16 %v483
      %v502 = vunpack.c.l.b16 %v484
      %v503 = vunpack.c.l.b16 %v485
      %v504 = vunpack.c.l.b16 %v486
      %v505 = vunpack.c.l.b16 %v487
      %v506 = vunpack.c.l.b16 %v488
      %v507 = vpack.c.b16 %v500, %v499
      %v508 = vpack.c.b16 %v502, %v501
      %v509 = vpack.c.b16 %v504, %v503
      %v510 = vpack.c.b16 %v506, %v505
      %v512 = vsel %vm296, %v507, 0
      %v515 = vsel %vm296, %v508, 0
      %v518 = vsel %vm296, %v509, 0
      %v521 = vsel %vm296, %v510, 0
      %v524 = vsel %vm309, %v490, 0
      %526 = vmatprep.subr.bf16.mxu0 0
      %527 = vmatpush1.bf16.msra.mxu0 0
      %528 = vmatprep.subr.bf16.mxu0 0
      %529 = vmatpush1.bf16.msra.mxu0 0
      %530 = vmatprep.subr.bf16.mxu0 0
      %531 = vmatpush1.bf16.msra.mxu0 0
      %532 = vmatprep.subr.bf16.mxu0 0
      %533 = vmatpush1.bf16.msra.mxu0 0
      %534 = vmatprep.subr.bf16.mxu0 0
      %535 = vmatpush1.bf16.msra.mxu0 0
      %536 = vmatprep.subr.bf16.mxu0 0
      %537 = vmatpush1.bf16.msra.mxu0 0
      %538 = vmatprep.subr.bf16.mxu0 0
      %539 = vmatpush1.bf16.msra.mxu0 0
      %540 = vmatprep.subr.bf16.mxu0 0
      %541 = vmatpush1.bf16.msra.mxu0 %v524
      %542 = vmatprep.subr.bf16.mxu0 0
      %543 = vmatpush2.bf16.msra.mxu0 0
      %544 = vmatprep.subr.bf16.mxu0 0
      %545 = vmatpush2.bf16.msra.mxu0 0
      %546 = vmatprep.subr.bf16.mxu0 0
      %547 = vmatpush2.bf16.msra.mxu0 0
      %548 = vmatprep.subr.bf16.mxu0 0
      %549 = vmatpush2.bf16.msra.mxu0 0
      %550 = vmatprep.subr.bf16.mxu0 0
      %551 = vmatpush2.bf16.msra.mxu0 0
      %552 = vmatprep.subr.bf16.mxu0 0
      %553 = vmatpush2.bf16.msra.mxu0 0
      %554 = vmatprep.subr.bf16.mxu0 0
      %555 = vmatpush2.bf16.msra.mxu0 0
      %556 = vmatprep.subr.bf16.mxu0 0
      %557 = vmatpush2.bf16.msra.mxu0 0
      %558 = vmatprep.mubr.bf16.mxu0 0
      %559 = vmatmul.mubr.bf16.gmra.mxu0 %v512
      %v560 = vpop.f32.mrf.mxu0
      %v561 = vadd.f32 0.0, %v560
      %v562 = vpop.f32.mrf.mxu0
      %v563 = vpop.f32.mrf.mxu0
      %v564 = vadd.f32 0.0, %v563
      %v565 = vpop.f32.mrf.mxu0
      %566 = vmatprep.mubr.bf16.mxu0 0
      %567 = vmatmul.mubr.bf16.gmra.mxu0 %v515
      %v568 = vpop.f32.mrf.mxu0
      %v569 = vadd.f32 0.0, %v568
      %v570 = vpop.f32.mrf.mxu0
      %v571 = vpop.f32.mrf.mxu0
      %v572 = vadd.f32 0.0, %v571
      %v573 = vpop.f32.mrf.mxu0
      %574 = vmatprep.mubr.bf16.mxu0 0
      %575 = vmatmul.mubr.bf16.gmra.mxu0 %v518
      %v576 = vpop.f32.mrf.mxu0
      %v577 = vadd.f32 0.0, %v576
      %v578 = vpop.f32.mrf.mxu0
      %v579 = vpop.f32.mrf.mxu0
      %v580 = vadd.f32 0.0, %v579
      %v581 = vpop.f32.mrf.mxu0
      %582 = vmatprep.mubr.bf16.mxu0 0
      %583 = vmatmul.mubr.bf16.gmra.mxu0 %v521
      %v584 = vpop.f32.mrf.mxu0
      %v585 = vadd.f32 0.0, %v584
      %v586 = vpop.f32.mrf.mxu0
      %v587 = vpop.f32.mrf.mxu0
      %v588 = vadd.f32 0.0, %v587
      %v589 = vpop.f32.mrf.mxu0
      %590 = vdwg.mxu0
      %v591 = vadd.f32 %v448, %v561
      %v592 = vadd.f32 %v451, %v564
      %v593 = vadd.f32 %v456, %v569
      %v594 = vadd.f32 %v459, %v572
      %v595 = vadd.f32 %v464, %v577
      %v596 = vadd.f32 %v467, %v580
      %v597 = vadd.f32 %v472, %v585
      %v598 = vadd.f32 %v475, %v588
      %s599 = sadd.s32 %s250, 27
      %s600 = smul.addr %s599, 4
      %s601 = scalar_lea.vmem %s237, %s600
      %v602 = vld [vmem:[%s601] sm:$0xf]
      %v603 = vld [vmem:[%s601 + $0x4] sm:$0xf]
      %v604 = vld [vmem:[%s601 + $0x8] sm:$0xf]
      %v605 = vld [vmem:[%s601 + $0xc] sm:$0xf]
      %v606 = vld [vmem:[%s601 + $0x10] sm:$0xf]
      %v607 = vld [vmem:[%s601 + $0x14] sm:$0xf]
      %v608 = vld [vmem:[%s601 + $0x18] sm:$0xf]
      %v609 = vld [vmem:[%s601 + $0x1c] sm:$0xf]
      %s610 = scalar_lea.vmem %s1, 6
      %v611 = vld [vmem:[%s610] sm:$0x3]
      %v620 = vunpack.c.l.b16 %v602
      %v621 = vunpack.c.l.b16 %v603
      %v622 = vunpack.c.l.b16 %v604
      %v623 = vunpack.c.l.b16 %v605
      %v624 = vunpack.c.l.b16 %v606
      %v625 = vunpack.c.l.b16 %v607
      %v626 = vunpack.c.l.b16 %v608
      %v627 = vunpack.c.l.b16 %v609
      %v628 = vpack.c.b16 %v621, %v620
      %v629 = vpack.c.b16 %v623, %v622
      %v630 = vpack.c.b16 %v625, %v624
      %v631 = vpack.c.b16 %v627, %v626
      %v633 = vsel %vm296, %v628, 0
      %v636 = vsel %vm296, %v629, 0
      %v639 = vsel %vm296, %v630, 0
      %v642 = vsel %vm296, %v631, 0
      %v645 = vsel %vm309, %v611, 0
      %647 = vmatprep.subr.bf16.mxu0 0
      %648 = vmatpush1.bf16.msra.mxu0 0
      %649 = vmatprep.subr.bf16.mxu0 0
      %650 = vmatpush1.bf16.msra.mxu0 0
      %651 = vmatprep.subr.bf16.mxu0 0
      %652 = vmatpush1.bf16.msra.mxu0 0
      %653 = vmatprep.subr.bf16.mxu0 0
      %654 = vmatpush1.bf16.msra.mxu0 0
      %655 = vmatprep.subr.bf16.mxu0 0
      %656 = vmatpush1.bf16.msra.mxu0 0
      %657 = vmatprep.subr.bf16.mxu0 0
      %658 = vmatpush1.bf16.msra.mxu0 0
      %659 = vmatprep.subr.bf16.mxu0 0
      %660 = vmatpush1.bf16.msra.mxu0 0
      %661 = vmatprep.subr.bf16.mxu0 0
      %662 = vmatpush1.bf16.msra.mxu0 %v645
      %663 = vmatprep.subr.bf16.mxu0 0
      %664 = vmatpush2.bf16.msra.mxu0 0
      %665 = vmatprep.subr.bf16.mxu0 0
      %666 = vmatpush2.bf16.msra.mxu0 0
      %667 = vmatprep.subr.bf16.mxu0 0
      %668 = vmatpush2.bf16.msra.mxu0 0
      %669 = vmatprep.subr.bf16.mxu0 0
      %670 = vmatpush2.bf16.msra.mxu0 0
      %671 = vmatprep.subr.bf16.mxu0 0
      %672 = vmatpush2.bf16.msra.mxu0 0
      %673 = vmatprep.subr.bf16.mxu0 0
      %674 = vmatpush2.bf16.msra.mxu0 0
      %675 = vmatprep.subr.bf16.mxu0 0
      %676 = vmatpush2.bf16.msra.mxu0 0
      %677 = vmatprep.subr.bf16.mxu0 0
      %678 = vmatpush2.bf16.msra.mxu0 0
      %679 = vmatprep.mubr.bf16.mxu0 0
      %680 = vmatmul.mubr.bf16.gmra.mxu0 %v633
      %v681 = vpop.f32.mrf.mxu0
      %v682 = vadd.f32 0.0, %v681
      %v683 = vpop.f32.mrf.mxu0
      %v684 = vpop.f32.mrf.mxu0
      %v685 = vadd.f32 0.0, %v684
      %v686 = vpop.f32.mrf.mxu0
      %687 = vmatprep.mubr.bf16.mxu0 0
      %688 = vmatmul.mubr.bf16.gmra.mxu0 %v636
      %v689 = vpop.f32.mrf.mxu0
      %v690 = vadd.f32 0.0, %v689
      %v691 = vpop.f32.mrf.mxu0
      %v692 = vpop.f32.mrf.mxu0
      %v693 = vadd.f32 0.0, %v692
      %v694 = vpop.f32.mrf.mxu0
      %695 = vmatprep.mubr.bf16.mxu0 0
      %696 = vmatmul.mubr.bf16.gmra.mxu0 %v639
      %v697 = vpop.f32.mrf.mxu0
      %v698 = vadd.f32 0.0, %v697
      %v699 = vpop.f32.mrf.mxu0
      %v700 = vpop.f32.mrf.mxu0
      %v701 = vadd.f32 0.0, %v700
      %v702 = vpop.f32.mrf.mxu0
      %703 = vmatprep.mubr.bf16.mxu0 0
      %704 = vmatmul.mubr.bf16.gmra.mxu0 %v642
      %v705 = vpop.f32.mrf.mxu0
      %v706 = vadd.f32 0.0, %v705
      %v707 = vpop.f32.mrf.mxu0
      %v708 = vpop.f32.mrf.mxu0
      %v709 = vadd.f32 0.0, %v708
      %v710 = vpop.f32.mrf.mxu0
      %711 = vdwg.mxu0
      %v712 = vadd.f32 %v591, %v682
      %v713 = vadd.f32 %v592, %v685
      %v714 = vadd.f32 %v593, %v690
      %v715 = vadd.f32 %v594, %v693
      %v716 = vadd.f32 %v595, %v698
      %v717 = vadd.f32 %v596, %v701
      %v718 = vadd.f32 %v597, %v706
      %v719 = vadd.f32 %v598, %v709
      %s720 = sadd.s32 %s250, 36
      %s721 = smul.addr %s720, 4
      %s722 = scalar_lea.vmem %s237, %s721
      %v723 = vld [vmem:[%s722] sm:$0xf]
      %v724 = vld [vmem:[%s722 + $0x4] sm:$0xf]
      %v725 = vld [vmem:[%s722 + $0x8] sm:$0xf]
      %v726 = vld [vmem:[%s722 + $0xc] sm:$0xf]
      %v727 = vld [vmem:[%s722 + $0x10] sm:$0xf]
      %v728 = vld [vmem:[%s722 + $0x14] sm:$0xf]
      %v729 = vld [vmem:[%s722 + $0x18] sm:$0xf]
      %v730 = vld [vmem:[%s722 + $0x1c] sm:$0xf]
      %s731 = scalar_lea.vmem %s1, 8
      %v732 = vld [vmem:[%s731] sm:$0x3]
      %v741 = vunpack.c.l.b16 %v723
      %v742 = vunpack.c.l.b16 %v724
      %v743 = vunpack.c.l.b16 %v725
      %v744 = vunpack.c.l.b16 %v726
      %v745 = vunpack.c.l.b16 %v727
      %v746 = vunpack.c.l.b16 %v728
      %v747 = vunpack.c.l.b16 %v729
      %v748 = vunpack.c.l.b16 %v730
      %v749 = vpack.c.b16 %v742, %v741
      %v750 = vpack.c.b16 %v744, %v743
      %v751 = vpack.c.b16 %v746, %v745
      %v752 = vpack.c.b16 %v748, %v747
      %v754 = vsel %vm296, %v749, 0
      %v757 = vsel %vm296, %v750, 0
      %v760 = vsel %vm296, %v751, 0
      %v763 = vsel %vm296, %v752, 0
      %v766 = vsel %vm309, %v732, 0
      %768 = vmatprep.subr.bf16.mxu0 0
      %769 = vmatpush1.bf16.msra.mxu0 0
      %770 = vmatprep.subr.bf16.mxu0 0
      %771 = vmatpush1.bf16.msra.mxu0 0
      %772 = vmatprep.subr.bf16.mxu0 0
      %773 = vmatpush1.bf16.msra.mxu0 0
      %774 = vmatprep.subr.bf16.mxu0 0
      %775 = vmatpush1.bf16.msra.mxu0 0
      %776 = vmatprep.subr.bf16.mxu0 0
      %777 = vmatpush1.bf16.msra.mxu0 0
      %778 = vmatprep.subr.bf16.mxu0 0
      %779 = vmatpush1.bf16.msra.mxu0 0
      %780 = vmatprep.subr.bf16.mxu0 0
      %781 = vmatpush1.bf16.msra.mxu0 0
      %782 = vmatprep.subr.bf16.mxu0 0
      %783 = vmatpush1.bf16.msra.mxu0 %v766
      %784 = vmatprep.subr.bf16.mxu0 0
      %785 = vmatpush2.bf16.msra.mxu0 0
      %786 = vmatprep.subr.bf16.mxu0 0
      %787 = vmatpush2.bf16.msra.mxu0 0
      %788 = vmatprep.subr.bf16.mxu0 0
      %789 = vmatpush2.bf16.msra.mxu0 0
      %790 = vmatprep.subr.bf16.mxu0 0
      %791 = vmatpush2.bf16.msra.mxu0 0
      %792 = vmatprep.subr.bf16.mxu0 0
      %793 = vmatpush2.bf16.msra.mxu0 0
      %794 = vmatprep.subr.bf16.mxu0 0
      %795 = vmatpush2.bf16.msra.mxu0 0
      %796 = vmatprep.subr.bf16.mxu0 0
      %797 = vmatpush2.bf16.msra.mxu0 0
      %798 = vmatprep.subr.bf16.mxu0 0
      %799 = vmatpush2.bf16.msra.mxu0 0
      %800 = vmatprep.mubr.bf16.mxu0 0
      %801 = vmatmul.mubr.bf16.gmra.mxu0 %v754
      %v802 = vpop.f32.mrf.mxu0
      %v803 = vadd.f32 0.0, %v802
      %v804 = vpop.f32.mrf.mxu0
      %v805 = vpop.f32.mrf.mxu0
      %v806 = vadd.f32 0.0, %v805
      %v807 = vpop.f32.mrf.mxu0
      %808 = vmatprep.mubr.bf16.mxu0 0
      %809 = vmatmul.mubr.bf16.gmra.mxu0 %v757
      %v810 = vpop.f32.mrf.mxu0
      %v811 = vadd.f32 0.0, %v810
      %v812 = vpop.f32.mrf.mxu0
      %v813 = vpop.f32.mrf.mxu0
      %v814 = vadd.f32 0.0, %v813
      %v815 = vpop.f32.mrf.mxu0
      %816 = vmatprep.mubr.bf16.mxu0 0
      %817 = vmatmul.mubr.bf16.gmra.mxu0 %v760
      %v818 = vpop.f32.mrf.mxu0
      %v819 = vadd.f32 0.0, %v818
      %v820 = vpop.f32.mrf.mxu0
      %v821 = vpop.f32.mrf.mxu0
      %v822 = vadd.f32 0.0, %v821
      %v823 = vpop.f32.mrf.mxu0
      %824 = vmatprep.mubr.bf16.mxu0 0
      %825 = vmatmul.mubr.bf16.gmra.mxu0 %v763
      %v826 = vpop.f32.mrf.mxu0
      %v827 = vadd.f32 0.0, %v826
      %v828 = vpop.f32.mrf.mxu0
      %v829 = vpop.f32.mrf.mxu0
      %v830 = vadd.f32 0.0, %v829
      %v831 = vpop.f32.mrf.mxu0
      %832 = vdwg.mxu0
      %v833 = vadd.f32 %v712, %v803
      %v834 = vadd.f32 %v713, %v806
      %v835 = vadd.f32 %v714, %v811
      %v836 = vadd.f32 %v715, %v814
      %v837 = vadd.f32 %v716, %v819
      %v838 = vadd.f32 %v717, %v822
      %v839 = vadd.f32 %v718, %v827
      %v840 = vadd.f32 %v719, %v830
      %s841 = sadd.s32 %s250, 45
      %s842 = smul.addr %s841, 4
      %s843 = scalar_lea.vmem %s237, %s842
      %v844 = vld [vmem:[%s843] sm:$0xf]
      %v845 = vld [vmem:[%s843 + $0x4] sm:$0xf]
      %v846 = vld [vmem:[%s843 + $0x8] sm:$0xf]
      %v847 = vld [vmem:[%s843 + $0xc] sm:$0xf]
      %v848 = vld [vmem:[%s843 + $0x10] sm:$0xf]
      %v849 = vld [vmem:[%s843 + $0x14] sm:$0xf]
      %v850 = vld [vmem:[%s843 + $0x18] sm:$0xf]
      %v851 = vld [vmem:[%s843 + $0x1c] sm:$0xf]
      %s852 = scalar_lea.vmem %s1, 10
      %v853 = vld [vmem:[%s852] sm:$0x3]
      %v862 = vunpack.c.l.b16 %v844
      %v863 = vunpack.c.l.b16 %v845
      %v864 = vunpack.c.l.b16 %v846
      %v865 = vunpack.c.l.b16 %v847
      %v866 = vunpack.c.l.b16 %v848
      %v867 = vunpack.c.l.b16 %v849
      %v868 = vunpack.c.l.b16 %v850
      %v869 = vunpack.c.l.b16 %v851
      %v870 = vpack.c.b16 %v863, %v862
      %v871 = vpack.c.b16 %v865, %v864
      %v872 = vpack.c.b16 %v867, %v866
      %v873 = vpack.c.b16 %v869, %v868
      %v875 = vsel %vm296, %v870, 0
      %v878 = vsel %vm296, %v871, 0
      %v881 = vsel %vm296, %v872, 0
      %v884 = vsel %vm296, %v873, 0
      %v887 = vsel %vm309, %v853, 0
      %889 = vmatprep.subr.bf16.mxu0 0
      %890 = vmatpush1.bf16.msra.mxu0 0
      %891 = vmatprep.subr.bf16.mxu0 0
      %892 = vmatpush1.bf16.msra.mxu0 0
      %893 = vmatprep.subr.bf16.mxu0 0
      %894 = vmatpush1.bf16.msra.mxu0 0
      %895 = vmatprep.subr.bf16.mxu0 0
      %896 = vmatpush1.bf16.msra.mxu0 0
      %897 = vmatprep.subr.bf16.mxu0 0
      %898 = vmatpush1.bf16.msra.mxu0 0
      %899 = vmatprep.subr.bf16.mxu0 0
      %900 = vmatpush1.bf16.msra.mxu0 0
      %901 = vmatprep.subr.bf16.mxu0 0
      %902 = vmatpush1.bf16.msra.mxu0 0
      %903 = vmatprep.subr.bf16.mxu0 0
      %904 = vmatpush1.bf16.msra.mxu0 %v887
      %905 = vmatprep.subr.bf16.mxu0 0
      %906 = vmatpush2.bf16.msra.mxu0 0
      %907 = vmatprep.subr.bf16.mxu0 0
      %908 = vmatpush2.bf16.msra.mxu0 0
      %909 = vmatprep.subr.bf16.mxu0 0
      %910 = vmatpush2.bf16.msra.mxu0 0
      %911 = vmatprep.subr.bf16.mxu0 0
      %912 = vmatpush2.bf16.msra.mxu0 0
      %913 = vmatprep.subr.bf16.mxu0 0
      %914 = vmatpush2.bf16.msra.mxu0 0
      %915 = vmatprep.subr.bf16.mxu0 0
      %916 = vmatpush2.bf16.msra.mxu0 0
      %917 = vmatprep.subr.bf16.mxu0 0
      %918 = vmatpush2.bf16.msra.mxu0 0
      %919 = vmatprep.subr.bf16.mxu0 0
      %920 = vmatpush2.bf16.msra.mxu0 0
      %921 = vmatprep.mubr.bf16.mxu0 0
      %922 = vmatmul.mubr.bf16.gmra.mxu0 %v875
      %v923 = vpop.f32.mrf.mxu0
      %v924 = vadd.f32 0.0, %v923
      %v925 = vpop.f32.mrf.mxu0
      %v926 = vpop.f32.mrf.mxu0
      %v927 = vadd.f32 0.0, %v926
      %v928 = vpop.f32.mrf.mxu0
      %929 = vmatprep.mubr.bf16.mxu0 0
      %930 = vmatmul.mubr.bf16.gmra.mxu0 %v878
      %v931 = vpop.f32.mrf.mxu0
      %v932 = vadd.f32 0.0, %v931
      %v933 = vpop.f32.mrf.mxu0
      %v934 = vpop.f32.mrf.mxu0
      %v935 = vadd.f32 0.0, %v934
      %v936 = vpop.f32.mrf.mxu0
      %937 = vmatprep.mubr.bf16.mxu0 0
      %938 = vmatmul.mubr.bf16.gmra.mxu0 %v881
      %v939 = vpop.f32.mrf.mxu0
      %v940 = vadd.f32 0.0, %v939
      %v941 = vpop.f32.mrf.mxu0
      %v942 = vpop.f32.mrf.mxu0
      %v943 = vadd.f32 0.0, %v942
      %v944 = vpop.f32.mrf.mxu0
      %945 = vmatprep.mubr.bf16.mxu0 0
      %946 = vmatmul.mubr.bf16.gmra.mxu0 %v884
      %v947 = vpop.f32.mrf.mxu0
      %v948 = vadd.f32 0.0, %v947
      %v949 = vpop.f32.mrf.mxu0
      %v950 = vpop.f32.mrf.mxu0
      %v951 = vadd.f32 0.0, %v950
      %v952 = vpop.f32.mrf.mxu0
      %953 = vdwg.mxu0
      %v954 = vadd.f32 %v833, %v924
      %v955 = vadd.f32 %v834, %v927
      %v956 = vadd.f32 %v835, %v932
      %v957 = vadd.f32 %v836, %v935
      %v958 = vadd.f32 %v837, %v940
      %v959 = vadd.f32 %v838, %v943
      %v960 = vadd.f32 %v839, %v948
      %v961 = vadd.f32 %v840, %v951
      %s962 = sadd.s32 %s249, 8
      %s963 = sshra.s32 %s962, 3
      %s964 = sand.u32 %s962, 7
      %s965 = smul.addr %s963, 4
      %s966 = scalar_lea.vmem %s237, %s965
      %v967 = vld [vmem:[%s966] sm:$0xf]
      %v968 = vld [vmem:[%s966 + $0x4] sm:$0xf]
      %v969 = vld [vmem:[%s966 + $0x8] sm:$0xf]
      %v970 = vld [vmem:[%s966 + $0xc] sm:$0xf]
      %v971 = vld [vmem:[%s966 + $0x10] sm:$0xf]
      %v972 = vld [vmem:[%s966 + $0x14] sm:$0xf]
      %v973 = vld [vmem:[%s966 + $0x18] sm:$0xf]
      %v974 = vld [vmem:[%s966 + $0x1c] sm:$0xf]
      %s975 = scalar_lea.vmem %s1, 12
      %v976 = vld [vmem:[%s975] sm:$0x3]
      %v985 = vunpack.c.l.b16 %v967
      %v986 = vunpack.c.l.b16 %v968
      %v987 = vunpack.c.l.b16 %v969
      %v988 = vunpack.c.l.b16 %v970
      %v989 = vunpack.c.l.b16 %v971
      %v990 = vunpack.c.l.b16 %v972
      %v991 = vunpack.c.l.b16 %v973
      %v992 = vunpack.c.l.b16 %v974
      %v993 = vpack.c.b16 %v986, %v985
      %v994 = vpack.c.b16 %v988, %v987
      %v995 = vpack.c.b16 %v990, %v989
      %v996 = vpack.c.b16 %v992, %v991
      %v998 = vsel %vm296, %v993, 0
      %v1001 = vsel %vm296, %v994, 0
      %v1004 = vsel %vm296, %v995, 0
      %v1007 = vsel %vm296, %v996, 0
      %v1010 = vsel %vm309, %v976, 0
      %1012 = vmatprep.subr.bf16.mxu0 0
      %1013 = vmatpush1.bf16.msra.mxu0 0
      %1014 = vmatprep.subr.bf16.mxu0 0
      %1015 = vmatpush1.bf16.msra.mxu0 0
      %1016 = vmatprep.subr.bf16.mxu0 0
      %1017 = vmatpush1.bf16.msra.mxu0 0
      %1018 = vmatprep.subr.bf16.mxu0 0
      %1019 = vmatpush1.bf16.msra.mxu0 0
      %1020 = vmatprep.subr.bf16.mxu0 0
      %1021 = vmatpush1.bf16.msra.mxu0 0
      %1022 = vmatprep.subr.bf16.mxu0 0
      %1023 = vmatpush1.bf16.msra.mxu0 0
      %1024 = vmatprep.subr.bf16.mxu0 0
      %1025 = vmatpush1.bf16.msra.mxu0 0
      %1026 = vmatprep.subr.bf16.mxu0 0
      %1027 = vmatpush1.bf16.msra.mxu0 %v1010
      %1028 = vmatprep.subr.bf16.mxu0 0
      %1029 = vmatpush2.bf16.msra.mxu0 0
      %1030 = vmatprep.subr.bf16.mxu0 0
      %1031 = vmatpush2.bf16.msra.mxu0 0
      %1032 = vmatprep.subr.bf16.mxu0 0
      %1033 = vmatpush2.bf16.msra.mxu0 0
      %1034 = vmatprep.subr.bf16.mxu0 0
      %1035 = vmatpush2.bf16.msra.mxu0 0
      %1036 = vmatprep.subr.bf16.mxu0 0
      %1037 = vmatpush2.bf16.msra.mxu0 0
      %1038 = vmatprep.subr.bf16.mxu0 0
      %1039 = vmatpush2.bf16.msra.mxu0 0
      %1040 = vmatprep.subr.bf16.mxu0 0
      %1041 = vmatpush2.bf16.msra.mxu0 0
      %1042 = vmatprep.subr.bf16.mxu0 0
      %1043 = vmatpush2.bf16.msra.mxu0 0
      %1044 = vmatprep.mubr.bf16.mxu0 0
      %1045 = vmatmul.mubr.bf16.gmra.mxu0 %v998
      %v1046 = vpop.f32.mrf.mxu0
      %v1047 = vadd.f32 0.0, %v1046
      %v1048 = vpop.f32.mrf.mxu0
      %v1049 = vpop.f32.mrf.mxu0
      %v1050 = vadd.f32 0.0, %v1049
      %v1051 = vpop.f32.mrf.mxu0
      %1052 = vmatprep.mubr.bf16.mxu0 0
      %1053 = vmatmul.mubr.bf16.gmra.mxu0 %v1001
      %v1054 = vpop.f32.mrf.mxu0
      %v1055 = vadd.f32 0.0, %v1054
      %v1056 = vpop.f32.mrf.mxu0
      %v1057 = vpop.f32.mrf.mxu0
      %v1058 = vadd.f32 0.0, %v1057
      %v1059 = vpop.f32.mrf.mxu0
      %1060 = vmatprep.mubr.bf16.mxu0 0
      %1061 = vmatmul.mubr.bf16.gmra.mxu0 %v1004
      %v1062 = vpop.f32.mrf.mxu0
      %v1063 = vadd.f32 0.0, %v1062
      %v1064 = vpop.f32.mrf.mxu0
      %v1065 = vpop.f32.mrf.mxu0
      %v1066 = vadd.f32 0.0, %v1065
      %v1067 = vpop.f32.mrf.mxu0
      %1068 = vmatprep.mubr.bf16.mxu0 0
      %1069 = vmatmul.mubr.bf16.gmra.mxu0 %v1007
      %v1070 = vpop.f32.mrf.mxu0
      %v1071 = vadd.f32 0.0, %v1070
      %v1072 = vpop.f32.mrf.mxu0
      %v1073 = vpop.f32.mrf.mxu0
      %v1074 = vadd.f32 0.0, %v1073
      %v1075 = vpop.f32.mrf.mxu0
      %1076 = vdwg.mxu0
      %v1077 = vadd.f32 %v954, %v1047
      %v1078 = vadd.f32 %v955, %v1050
      %v1079 = vadd.f32 %v956, %v1055
      %v1080 = vadd.f32 %v957, %v1058
      %v1081 = vadd.f32 %v958, %v1063
      %v1082 = vadd.f32 %v959, %v1066
      %v1083 = vadd.f32 %v960, %v1071
      %v1084 = vadd.f32 %v961, %v1074
      %s1085 = sadd.s32 %s963, 9
      %s1086 = smul.addr %s1085, 4
      %s1087 = scalar_lea.vmem %s237, %s1086
      %v1088 = vld [vmem:[%s1087] sm:$0xf]
      %v1089 = vld [vmem:[%s1087 + $0x4] sm:$0xf]
      %v1090 = vld [vmem:[%s1087 + $0x8] sm:$0xf]
      %v1091 = vld [vmem:[%s1087 + $0xc] sm:$0xf]
      %v1092 = vld [vmem:[%s1087 + $0x10] sm:$0xf]
      %v1093 = vld [vmem:[%s1087 + $0x14] sm:$0xf]
      %v1094 = vld [vmem:[%s1087 + $0x18] sm:$0xf]
      %v1095 = vld [vmem:[%s1087 + $0x1c] sm:$0xf]
      %s1096 = scalar_lea.vmem %s1, 14
      %v1097 = vld [vmem:[%s1096] sm:$0x3]
      %v1106 = vunpack.c.l.b16 %v1088
      %v1107 = vunpack.c.l.b16 %v1089
      %v1108 = vunpack.c.l.b16 %v1090
      %v1109 = vunpack.c.l.b16 %v1091
      %v1110 = vunpack.c.l.b16 %v1092
      %v1111 = vunpack.c.l.b16 %v1093
      %v1112 = vunpack.c.l.b16 %v1094
      %v1113 = vunpack.c.l.b16 %v1095
      %v1114 = vpack.c.b16 %v1107, %v1106
      %v1115 = vpack.c.b16 %v1109, %v1108
      %v1116 = vpack.c.b16 %v1111, %v1110
      %v1117 = vpack.c.b16 %v1113, %v1112
      %v1119 = vsel %vm296, %v1114, 0
      %v1122 = vsel %vm296, %v1115, 0
      %v1125 = vsel %vm296, %v1116, 0
      %v1128 = vsel %vm296, %v1117, 0
      %v1131 = vsel %vm309, %v1097, 0
      %1133 = vmatprep.subr.bf16.mxu0 0
      %1134 = vmatpush1.bf16.msra.mxu0 0
      %1135 = vmatprep.subr.bf16.mxu0 0
      %1136 = vmatpush1.bf16.msra.mxu0 0
      %1137 = vmatprep.subr.bf16.mxu0 0
      %1138 = vmatpush1.bf16.msra.mxu0 0
      %1139 = vmatprep.subr.bf16.mxu0 0
      %1140 = vmatpush1.bf16.msra.mxu0 0
      %1141 = vmatprep.subr.bf16.mxu0 0
      %1142 = vmatpush1.bf16.msra.mxu0 0
      %1143 = vmatprep.subr.bf16.mxu0 0
      %1144 = vmatpush1.bf16.msra.mxu0 0
      %1145 = vmatprep.subr.bf16.mxu0 0
      %1146 = vmatpush1.bf16.msra.mxu0 0
      %1147 = vmatprep.subr.bf16.mxu0 0
      %1148 = vmatpush1.bf16.msra.mxu0 %v1131
      %1149 = vmatprep.subr.bf16.mxu0 0
      %1150 = vmatpush2.bf16.msra.mxu0 0
      %1151 = vmatprep.subr.bf16.mxu0 0
      %1152 = vmatpush2.bf16.msra.mxu0 0
      %1153 = vmatprep.subr.bf16.mxu0 0
      %1154 = vmatpush2.bf16.msra.mxu0 0
      %1155 = vmatprep.subr.bf16.mxu0 0
      %1156 = vmatpush2.bf16.msra.mxu0 0
      %1157 = vmatprep.subr.bf16.mxu0 0
      %1158 = vmatpush2.bf16.msra.mxu0 0
      %1159 = vmatprep.subr.bf16.mxu0 0
      %1160 = vmatpush2.bf16.msra.mxu0 0
      %1161 = vmatprep.subr.bf16.mxu0 0
      %1162 = vmatpush2.bf16.msra.mxu0 0
      %1163 = vmatprep.subr.bf16.mxu0 0
      %1164 = vmatpush2.bf16.msra.mxu0 0
      %1165 = vmatprep.mubr.bf16.mxu0 0
      %1166 = vmatmul.mubr.bf16.gmra.mxu0 %v1119
      %v1167 = vpop.f32.mrf.mxu0
      %v1168 = vadd.f32 0.0, %v1167
      %v1169 = vpop.f32.mrf.mxu0
      %v1170 = vpop.f32.mrf.mxu0
      %v1171 = vadd.f32 0.0, %v1170
      %v1172 = vpop.f32.mrf.mxu0
      %1173 = vmatprep.mubr.bf16.mxu0 0
      %1174 = vmatmul.mubr.bf16.gmra.mxu0 %v1122
      %v1175 = vpop.f32.mrf.mxu0
      %v1176 = vadd.f32 0.0, %v1175
      %v1177 = vpop.f32.mrf.mxu0
      %v1178 = vpop.f32.mrf.mxu0
      %v1179 = vadd.f32 0.0, %v1178
      %v1180 = vpop.f32.mrf.mxu0
      %1181 = vmatprep.mubr.bf16.mxu0 0
      %1182 = vmatmul.mubr.bf16.gmra.mxu0 %v1125
      %v1183 = vpop.f32.mrf.mxu0
      %v1184 = vadd.f32 0.0, %v1183
      %v1185 = vpop.f32.mrf.mxu0
      %v1186 = vpop.f32.mrf.mxu0
      %v1187 = vadd.f32 0.0, %v1186
      %v1188 = vpop.f32.mrf.mxu0
      %1189 = vmatprep.mubr.bf16.mxu0 0
      %1190 = vmatmul.mubr.bf16.gmra.mxu0 %v1128
      %v1191 = vpop.f32.mrf.mxu0
      %v1192 = vadd.f32 0.0, %v1191
      %v1193 = vpop.f32.mrf.mxu0
      %v1194 = vpop.f32.mrf.mxu0
      %v1195 = vadd.f32 0.0, %v1194
      %v1196 = vpop.f32.mrf.mxu0
      %1197 = vdwg.mxu0
      %v1198 = vadd.f32 %v1077, %v1168
      %v1199 = vadd.f32 %v1078, %v1171
      %v1200 = vadd.f32 %v1079, %v1176
      %v1201 = vadd.f32 %v1080, %v1179
      %v1202 = vadd.f32 %v1081, %v1184
      %v1203 = vadd.f32 %v1082, %v1187
      %v1204 = vadd.f32 %v1083, %v1192
      %v1205 = vadd.f32 %v1084, %v1195
      %s1206 = sadd.s32 %s963, 18
      %s1207 = smul.addr %s1206, 4
      %s1208 = scalar_lea.vmem %s237, %s1207
      %v1209 = vld [vmem:[%s1208] sm:$0xf]
      %v1210 = vld [vmem:[%s1208 + $0x4] sm:$0xf]
      %v1211 = vld [vmem:[%s1208 + $0x8] sm:$0xf]
      %v1212 = vld [vmem:[%s1208 + $0xc] sm:$0xf]
      %v1213 = vld [vmem:[%s1208 + $0x10] sm:$0xf]
      %v1214 = vld [vmem:[%s1208 + $0x14] sm:$0xf]
      %v1215 = vld [vmem:[%s1208 + $0x18] sm:$0xf]
      %v1216 = vld [vmem:[%s1208 + $0x1c] sm:$0xf]
      %s1217 = scalar_lea.vmem %s1, 16
      %v1218 = vld [vmem:[%s1217] sm:$0x3]
      %v1227 = vunpack.c.l.b16 %v1209
      %v1228 = vunpack.c.l.b16 %v1210
      %v1229 = vunpack.c.l.b16 %v1211
      %v1230 = vunpack.c.l.b16 %v1212
      %v1231 = vunpack.c.l.b16 %v1213
      %v1232 = vunpack.c.l.b16 %v1214
      %v1233 = vunpack.c.l.b16 %v1215
      %v1234 = vunpack.c.l.b16 %v1216
      %v1235 = vpack.c.b16 %v1228, %v1227
      %v1236 = vpack.c.b16 %v1230, %v1229
      %v1237 = vpack.c.b16 %v1232, %v1231
      %v1238 = vpack.c.b16 %v1234, %v1233
      %v1240 = vsel %vm296, %v1235, 0
      %v1243 = vsel %vm296, %v1236, 0
      %v1246 = vsel %vm296, %v1237, 0
      %v1249 = vsel %vm296, %v1238, 0
      %v1252 = vsel %vm309, %v1218, 0
      %1254 = vmatprep.subr.bf16.mxu0 0
      %1255 = vmatpush1.bf16.msra.mxu0 0
      %1256 = vmatprep.subr.bf16.mxu0 0
      %1257 = vmatpush1.bf16.msra.mxu0 0
      %1258 = vmatprep.subr.bf16.mxu0 0
      %1259 = vmatpush1.bf16.msra.mxu0 0
      %1260 = vmatprep.subr.bf16.mxu0 0
      %1261 = vmatpush1.bf16.msra.mxu0 0
      %1262 = vmatprep.subr.bf16.mxu0 0
      %1263 = vmatpush1.bf16.msra.mxu0 0
      %1264 = vmatprep.subr.bf16.mxu0 0
      %1265 = vmatpush1.bf16.msra.mxu0 0
      %1266 = vmatprep.subr.bf16.mxu0 0
      %1267 = vmatpush1.bf16.msra.mxu0 0
      %1268 = vmatprep.subr.bf16.mxu0 0
      %1269 = vmatpush1.bf16.msra.mxu0 %v1252
      %1270 = vmatprep.subr.bf16.mxu0 0
      %1271 = vmatpush2.bf16.msra.mxu0 0
      %1272 = vmatprep.subr.bf16.mxu0 0
      %1273 = vmatpush2.bf16.msra.mxu0 0
      %1274 = vmatprep.subr.bf16.mxu0 0
      %1275 = vmatpush2.bf16.msra.mxu0 0
      %1276 = vmatprep.subr.bf16.mxu0 0
      %1277 = vmatpush2.bf16.msra.mxu0 0
      %1278 = vmatprep.subr.bf16.mxu0 0
      %1279 = vmatpush2.bf16.msra.mxu0 0
      %1280 = vmatprep.subr.bf16.mxu0 0
      %1281 = vmatpush2.bf16.msra.mxu0 0
      %1282 = vmatprep.subr.bf16.mxu0 0
      %1283 = vmatpush2.bf16.msra.mxu0 0
      %1284 = vmatprep.subr.bf16.mxu0 0
      %1285 = vmatpush2.bf16.msra.mxu0 0
      %1286 = vmatprep.mubr.bf16.mxu0 0
      %1287 = vmatmul.mubr.bf16.gmra.mxu0 %v1240
      %v1288 = vpop.f32.mrf.mxu0
      %v1289 = vadd.f32 0.0, %v1288
      %v1290 = vpop.f32.mrf.mxu0
      %v1291 = vpop.f32.mrf.mxu0
      %v1292 = vadd.f32 0.0, %v1291
      %v1293 = vpop.f32.mrf.mxu0
      %1294 = vmatprep.mubr.bf16.mxu0 0
      %1295 = vmatmul.mubr.bf16.gmra.mxu0 %v1243
      %v1296 = vpop.f32.mrf.mxu0
      %v1297 = vadd.f32 0.0, %v1296
      %v1298 = vpop.f32.mrf.mxu0
      %v1299 = vpop.f32.mrf.mxu0
      %v1300 = vadd.f32 0.0, %v1299
      %v1301 = vpop.f32.mrf.mxu0
      %1302 = vmatprep.mubr.bf16.mxu0 0
      %1303 = vmatmul.mubr.bf16.gmra.mxu0 %v1246
      %v1304 = vpop.f32.mrf.mxu0
      %v1305 = vadd.f32 0.0, %v1304
      %v1306 = vpop.f32.mrf.mxu0
      %v1307 = vpop.f32.mrf.mxu0
      %v1308 = vadd.f32 0.0, %v1307
      %v1309 = vpop.f32.mrf.mxu0
      %1310 = vmatprep.mubr.bf16.mxu0 0
      %1311 = vmatmul.mubr.bf16.gmra.mxu0 %v1249
      %v1312 = vpop.f32.mrf.mxu0
      %v1313 = vadd.f32 0.0, %v1312
      %v1314 = vpop.f32.mrf.mxu0
      %v1315 = vpop.f32.mrf.mxu0
      %v1316 = vadd.f32 0.0, %v1315
      %v1317 = vpop.f32.mrf.mxu0
      %1318 = vdwg.mxu0
      %v1319 = vadd.f32 %v1198, %v1289
      %v1320 = vadd.f32 %v1199, %v1292
      %v1321 = vadd.f32 %v1200, %v1297
      %v1322 = vadd.f32 %v1201, %v1300
      %v1323 = vadd.f32 %v1202, %v1305
      %v1324 = vadd.f32 %v1203, %v1308
      %v1325 = vadd.f32 %v1204, %v1313
      %v1326 = vadd.f32 %v1205, %v1316
      %v1327 = vld [vmem:[%s2] sm:$0x1]
      %v1329 = vlaneseq
      %v1330 = vshrl.u32 %v1329, 7
      %v1331 = vsub.s32 0, %v1330
      %v1332 = vrot.slane %v1327, %v1331
      %v1334 = vadd.f32 %v1319, %v1332
      %v1335 = vadd.f32 %v1320, %v1332
      %v1336 = vadd.f32 %v1321, %v1332
      %v1337 = vadd.f32 %v1322, %v1332
      %v1338 = vadd.f32 %v1323, %v1332
      %v1339 = vadd.f32 %v1324, %v1332
      %v1340 = vadd.f32 %v1325, %v1332
      %v1341 = vadd.f32 %v1326, %v1332
      %vm1342 = vcmask 64512
      %v1343 = vsel %vm1342, %v1334, 0.0
      %1344 = vadd.xlane.f32.xlu0 %v1343
      %v1345 = vpop.xlane.xlu0 %1344
      %v1346 = vsel %vm1342, %v1335, 0.0
      %1347 = vadd.xlane.f32.xlu0 %v1346
      %v1348 = vpop.xlane.xlu0 %1347
      %v1349 = vsel %vm1342, %v1336, 0.0
      %1350 = vadd.xlane.f32.xlu0 %v1349
      %v1351 = vpop.xlane.xlu0 %1350
      %v1352 = vsel %vm1342, %v1337, 0.0
      %1353 = vadd.xlane.f32.xlu0 %v1352
      %v1354 = vpop.xlane.xlu0 %1353
      %v1355 = vsel %vm1342, %v1338, 0.0
      %1356 = vadd.xlane.f32.xlu0 %v1355
      %v1357 = vpop.xlane.xlu0 %1356
      %v1358 = vsel %vm1342, %v1339, 0.0
      %1359 = vadd.xlane.f32.xlu0 %v1358
      %v1360 = vpop.xlane.xlu0 %1359
      %v1361 = vsel %vm1342, %v1340, 0.0
      %1362 = vadd.xlane.f32.xlu0 %v1361
      %v1363 = vpop.xlane.xlu0 %1362
      %v1364 = vsel %vm1342, %v1341, 0.0
      %1365 = vadd.xlane.f32.xlu0 %v1364
      %v1366 = vpop.xlane.xlu0 %1365
      %v1367 = vrcp.pop 8.0
      %v1368 = vmul.f32 %v1345, %v1367
      %v1369 = vmul.f32 %v1348, %v1367
      %v1370 = vmul.f32 %v1351, %v1367
      %v1371 = vmul.f32 %v1354, %v1367
      %v1372 = vmul.f32 %v1357, %v1367
      %v1373 = vmul.f32 %v1360, %v1367
      %v1374 = vmul.f32 %v1363, %v1367
      %v1375 = vmul.f32 %v1366, %v1367
      %v1376 = vsub.f32 %v1334, %v1368
      %v1377 = vsub.f32 %v1335, %v1369
      %v1378 = vsub.f32 %v1336, %v1370
      %v1379 = vsub.f32 %v1337, %v1371
      %v1380 = vsub.f32 %v1338, %v1372
      %v1381 = vsub.f32 %v1339, %v1373
      %v1382 = vsub.f32 %v1340, %v1374
      %v1383 = vsub.f32 %v1341, %v1375
      %v1384 = vmul.f32 %v1376, %v1376
      %v1385 = vmul.f32 %v1377, %v1377
      %v1386 = vmul.f32 %v1378, %v1378
      %v1387 = vmul.f32 %v1379, %v1379
      %v1388 = vmul.f32 %v1380, %v1380
      %v1389 = vmul.f32 %v1381, %v1381
      %v1390 = vmul.f32 %v1382, %v1382
      %v1391 = vmul.f32 %v1383, %v1383
      %v1392 = vsel %vm1342, %v1384, 0.0
      %1393 = vadd.xlane.f32.xlu0 %v1392
      %v1394 = vpop.xlane.xlu0 %1393
      %v1395 = vsel %vm1342, %v1385, 0.0
      %1396 = vadd.xlane.f32.xlu0 %v1395
      %v1397 = vpop.xlane.xlu0 %1396
      %v1398 = vsel %vm1342, %v1386, 0.0
      %1399 = vadd.xlane.f32.xlu0 %v1398
      %v1400 = vpop.xlane.xlu0 %1399
      %v1401 = vsel %vm1342, %v1387, 0.0
      %1402 = vadd.xlane.f32.xlu0 %v1401
      %v1403 = vpop.xlane.xlu0 %1402
      %v1404 = vsel %vm1342, %v1388, 0.0
      %1405 = vadd.xlane.f32.xlu0 %v1404
      %v1406 = vpop.xlane.xlu0 %1405
      %v1407 = vsel %vm1342, %v1389, 0.0
      %1408 = vadd.xlane.f32.xlu0 %v1407
      %v1409 = vpop.xlane.xlu0 %1408
      %v1410 = vsel %vm1342, %v1390, 0.0
      %1411 = vadd.xlane.f32.xlu0 %v1410
      %v1412 = vpop.xlane.xlu0 %1411
      %v1413 = vsel %vm1342, %v1391, 0.0
      %1414 = vadd.xlane.f32.xlu0 %v1413
      %v1415 = vpop.xlane.xlu0 %1414
      %v1416 = vmul.f32 %v1394, %v1367
      %v1417 = vmul.f32 %v1397, %v1367
      %v1418 = vmul.f32 %v1400, %v1367
      %v1419 = vmul.f32 %v1403, %v1367
      %v1420 = vmul.f32 %v1406, %v1367
      %v1421 = vmul.f32 %v1409, %v1367
      %v1422 = vmul.f32 %v1412, %v1367
      %v1423 = vmul.f32 %v1415, %v1367
      %v1424 = vadd.f32 %v1416, 1e-05
      %v1425 = vadd.f32 %v1417, 1e-05
      %v1426 = vadd.f32 %v1418, 1e-05
      %v1427 = vadd.f32 %v1419, 1e-05
      %v1428 = vadd.f32 %v1420, 1e-05
      %v1429 = vadd.f32 %v1421, 1e-05
      %v1430 = vadd.f32 %v1422, 1e-05
      %v1431 = vadd.f32 %v1423, 1e-05
      %v1432 = vrsqrt.pop %v1424
      %v1433 = vrsqrt.pop %v1425
      %v1434 = vrsqrt.pop %v1426
      %v1435 = vrsqrt.pop %v1427
      %v1436 = vrsqrt.pop %v1428
      %v1437 = vrsqrt.pop %v1429
      %v1438 = vrsqrt.pop %v1430
      %v1439 = vrsqrt.pop %v1431
      %v1440 = vmul.f32 %v1376, %v1432
      %v1441 = vmul.f32 %v1377, %v1433
      %v1442 = vmul.f32 %v1378, %v1434
      %v1443 = vmul.f32 %v1379, %v1435
      %v1444 = vmul.f32 %v1380, %v1436
      %v1445 = vmul.f32 %v1381, %v1437
      %v1446 = vmul.f32 %v1382, %v1438
      %v1447 = vmul.f32 %v1383, %v1439
      %v1448 = vld [vmem:[%s3] sm:$0x1]
      %v1450 = vlaneseq
      %v1451 = vshrl.u32 %v1450, 7
      %v1452 = vsub.s32 0, %v1451
      %v1453 = vrot.slane %v1448, %v1452
      %v1455 = vmul.f32 %v1440, %v1453
      %v1456 = vmul.f32 %v1441, %v1453
      %v1457 = vmul.f32 %v1442, %v1453
      %v1458 = vmul.f32 %v1443, %v1453
      %v1459 = vmul.f32 %v1444, %v1453
      %v1460 = vmul.f32 %v1445, %v1453
      %v1461 = vmul.f32 %v1446, %v1453
      %v1462 = vmul.f32 %v1447, %v1453
      %v1463 = vld [vmem:[%s4] sm:$0x1]
      %v1465 = vlaneseq
      %v1466 = vshrl.u32 %v1465, 7
      %v1467 = vsub.s32 0, %v1466
      %v1468 = vrot.slane %v1463, %v1467
      %v1470 = vadd.f32 %v1455, %v1468
      %v1471 = vadd.f32 %v1456, %v1468
      %v1472 = vadd.f32 %v1457, %v1468
      %v1473 = vadd.f32 %v1458, %v1468
      %v1474 = vadd.f32 %v1459, %v1468
      %v1475 = vadd.f32 %v1460, %v1468
      %v1476 = vadd.f32 %v1461, %v1468
      %v1477 = vadd.f32 %v1462, %v1468
      %1478 = vst.msk [vmem:[%s246] sm:$0xff] %vm1342, %v1470
      %1479 = vst.msk [vmem:[%s246 + $0x8] sm:$0xff] %vm1342, %v1471
      %1480 = vst.msk [vmem:[%s246 + $0x10] sm:$0xff] %vm1342, %v1472
      %1481 = vst.msk [vmem:[%s246 + $0x18] sm:$0xff] %vm1342, %v1473
      %1482 = vst.msk [vmem:[%s246 + $0x20] sm:$0xff] %vm1342, %v1474
      %1483 = vst.msk [vmem:[%s246 + $0x28] sm:$0xff] %vm1342, %v1475
      %1484 = vst.msk [vmem:[%s246 + $0x30] sm:$0xff] %vm1342, %v1476
      %1485 = vst.msk [vmem:[%s246 + $0x38] sm:$0xff] %vm1342, %v1477
      %s1486 = smul.u32 8, %s21
      %p1487 = scmp.lt.s32.totalorder %s20, 1
      %s1488 = scalar_select %p1487, %s20, 1
      %p1489 = scmp.lt.s32.totalorder %s1486, 7
      %s1490 = scalar_select %p1489, %s1486, 7
      %s1491 = smul.addr %s1488, 8
      %s1492 = sadd.s32 %s1490, %s1491
      %s1493 = smul.addr %s1492, 8
      %s1494 = scalar_lea.vmem %s5, %s1493
      // Predicated region
      $region41: #{tpu_custom_call.1} parent=39 // pred_check
        %p1495 = pneg %p158
      $region42: #{tpu_custom_call.1} parent=39 // pred_check_branch
        %1497 = sbr.rel (%p1495) target = $region44
      $region43: #{tpu_custom_call.1} parent=39 // pred_region
        %s1498 = smul.u32 8, %s21
      $region44: #{tpu_custom_call.1} parent=39 // pred_fallthru
        _
    $region40: #{tpu_custom_call.1} parent=5 // pred_fallthru
      _
    %p1499 = scmp.le.s32.totalorder 2, %s11
    // Predicated region
    $region45: #{tpu_custom_call.1} parent=5 // pred_check
      %p1500 = pneg %p1499
    $region46: #{tpu_custom_call.1} parent=5 // pred_check_branch
      %1502 = sbr.rel (%p1500) target = $region48
    $region47: #{tpu_custom_call.1} parent=5 // pred_region
      %s1503 = ssub.s32 %s11, 2
      // Predicated region
      $region49: #{tpu_custom_call.1} parent=47 // pred_check
        %p1504 = pneg %p164
      $region50: #{tpu_custom_call.1} parent=47 // pred_check_branch
        %1506 = sbr.rel (%p1504) target = $region52
      $region51: #{tpu_custom_call.1} parent=47 // pred_region
        %s1507 = smul.u32 8, %s23
        %p1508 = scmp.lt.s32.totalorder %s22, 1
        %s1509 = scalar_select %p1508, %s22, 1
        %p1510 = scmp.lt.s32.totalorder %s1507, 7
        %s1511 = scalar_select %p1510, %s1507, 7
        %s1512 = smul.addr %s1509, 8
        %s1513 = sadd.s32 %s1511, %s1512
        %s1514 = smul.addr %s1513, 8
        %s1515 = scalar_lea.vmem %s5, %s1514
      $region52: #{tpu_custom_call.1} parent=47 // pred_fallthru
        _
    $region48: #{tpu_custom_call.1} parent=5 // pred_fallthru
      _
  $region6: #{tpu_custom_call.1} parent=0 // loop_footer
    %s15 = sadd.s32 1, %s11
  $region7: #{tpu_custom_call.1} parent=0 // loop_footer_branch
    %10 = sbr.rel target = $region3
  $region8: #{tpu_custom_call.1} parent=0 // loop_exit
    _

</llo_original>
